<compile_context>
chip_gen: v6e
topology: v6e:2x2x1
jax: 0.10.0
libtpu: 0.0.40
codegen_flags: <defaults>
</compile_context>

<pallas_src>
import functools

import jax
import jax.numpy as jnp
from jax.experimental import pallas as pl
from jax.experimental.pallas import tpu as pltpu

MODELS_TENSOR_PREDICITONS_KEY = "predictions"
OTHER_KEY = "other"

EPS = 1e-5
LANE = 128                       # TPU lane width
HALO = 128                       # halo block width (>= ntap - 1)
SUBLANE = 16                     # bf16 sublane packing
MAX_TILE = 4096                  # max lane-tile width for the conv kernels
STREAM_BUDGET = 6 * 1024 * 1024  # bytes of double-buffered streamed blocks / step
VMEM_LIMIT = 40 * 1024 * 1024    # fits v5e/v6e/v7x physical VMEM
ACT_DTYPE = jnp.bfloat16         # inter-layer activation / matmul operand dtype


# ----------------------------------------------------------------------------
# Helpers
# ----------------------------------------------------------------------------
def _round_up(n, m):
    return -(-n // m) * m


def _cdiv(a, b):
    return -(-a // b)


def bn_scale_shift(gamma, beta, mean, var):
    scale = gamma / jnp.sqrt(var + EPS)
    shift = beta - mean * scale
    return scale.astype(jnp.float32), shift.astype(jnp.float32)


# ----------------------------------------------------------------------------
# Pallas kernels
# ----------------------------------------------------------------------------
def _conv_relu_kernel(x_ref, h_ref, w_ref, b_ref, o_ref, *, ntap):
    """Conv (+ folded BN) + ReLU for one (batch, lane-tile) grid step.

    x_ref: (1, Cip, TL) main input block     h_ref: (1, Cip, 128) halo block
    w_ref: (ntap, Cop, Cip) packed weights   b_ref: (Cop, 1) folded bias (f32)
    o_ref: (1, Cop, TL)
    """
    x = x_ref[0]                                   # (Cip, TL) bf16
    tl = x.shape[-1]
    acc = jnp.dot(w_ref[0], x, preferred_element_type=jnp.float32)
    if ntap > 1:
        xh = jnp.concatenate([x, h_ref[0]], axis=-1)   # (Cip, TL + 128)
        for k in range(1, ntap):
            acc = acc + jnp.dot(w_ref[k], xh[:, k:k + tl],
                                preferred_element_type=jnp.float32)
    o_ref[0] = jnp.maximum(acc + b_ref[...], 0.0).astype(o_ref.dtype)


def _conv_res_kernel(x_ref, h_ref, w_ref, b_ref, r_ref, o_ref, *, ntap):
    """Conv + bias + residual add (no activation) for one grid step."""
    x = x_ref[0]
    tl = x.shape[-1]
    acc = jnp.dot(w_ref[0], x, preferred_element_type=jnp.float32)
    if ntap > 1:
        xh = jnp.concatenate([x, h_ref[0]], axis=-1)
        for k in range(1, ntap):
            acc = acc + jnp.dot(w_ref[k], xh[:, k:k + tl],
                                preferred_element_type=jnp.float32)
    acc = acc + b_ref[...] + r_ref[0].astype(jnp.float32)
    o_ref[0] = acc.astype(o_ref.dtype)


def _head_kernel(x_ref, s_ref, t_ref, w_ref, b_ref, o_ref, acc_ref, *,
                 inv_len, pad_cols):
    """final_bn + ReLU + mean over L + dense, tiled over L.

    x_ref: (B, Cp, TL) bf16 (zero-padded tail)   s/t_ref: (Cp, 1) f32
    w_ref: (Cp, out) f32   b_ref: (1, out) f32   acc_ref: (B, Cp) f32 scratch
    Padded columns of x are exactly zero, so their contribution is
    pad_cols * relu(shift) per channel -> subtracted once at finalize
    (no per-tile iota/mask, feedback #9).
    """
    i = pl.program_id(0)

    @pl.when(i == 0)
    def _():
        acc_ref[...] = jnp.zeros_like(acc_ref)

    cp = s_ref.shape[0]
    s = s_ref[...].reshape(1, cp, 1)
    t = t_ref[...].reshape(1, cp, 1)
    y = jnp.maximum(x_ref[...].astype(jnp.float32) * s + t, 0.0)
    acc_ref[...] += jnp.sum(y, axis=-1)                       # (B, Cp)

    @pl.when(i == pl.num_programs(0) - 1)
    def _():
        corr = float(pad_cols) * jnp.maximum(t_ref[...], 0.0).reshape(1, cp)
        m = (acc_ref[...] - corr) * inv_len
        o_ref[...] = (jnp.dot(m, w_ref[...], preferred_element_type=jnp.float32)
                      + b_ref[...])


# ----------------------------------------------------------------------------
# Conv wrapper: SAME-padded Conv1d (+ folded BN / pre-BN+ReLU / residual add)
# with in-kernel tap gather (no im2col).
# ----------------------------------------------------------------------------
def _choose_conv_tile(cip, cop, has_res, lout, batch):
    # double-buffered streamed bytes / lane: x (cip) + out (cop) [+ residual]
    per_lane = 2 * 2 * (cip + cop * (2 if has_res else 1))
    tl = (STREAM_BUDGET // max(per_lane, 1)) // LANE * LANE
    tl = max(LANE, min(MAX_TILE, tl))
    tl = min(tl, _round_up(lout, LANE))
    # v7x megacore: keep >= 2 grid steps when there is enough work
    if batch * _cdiv(lout, tl) < 2 and lout > LANE:
        tl = _round_up(_cdiv(lout, 2), LANE)
    return tl


def conv1d_block_pallas(x, wp, bp, c_out, kernel_size, stride, *,
                        in_bn=None, residual=None, res_ch_offset=0):
    """x: (B, Ci, L).  wp: (ntap, Cop, Cip) packed bf16 weights, bp: (Cop, 1) f32.

    in_bn    : optional (scale, shift) -> relu(x*s+t) applied BEFORE padding
               (block's bn1+relu1), fused into the single glue pass.
    residual : None        -> output = relu(conv + folded_bias)
               (B, Cr, Lout) -> output = conv + bias + residual (channel offset
               res_ch_offset), no activation.
    Returns (B, c_out, Lout) bf16.
    """
    B, Ci, L = x.shape
    ntap, Cop, Cip = wp.shape
    assert ntap - 1 <= HALO
    Lout = _cdiv(L, stride)
    p = max(0, (Lout - 1) * stride + kernel_size - L)
    pad_l = p // 2

    TL = _choose_conv_tile(Cip, Cop, residual is not None, Lout, B)
    nL = _cdiv(Lout, TL)
    Lin_p = nL * TL + HALO

    # ---- glue: (optional bn1+relu1) + SAME pad + phase split, all bf16, one fusion
    if in_bn is not None:
        s_in, t_in = in_bn
        xb = jnp.maximum(x.astype(jnp.float32) * s_in[None, :, None]
                         + t_in[None, :, None], 0.0).astype(ACT_DTYPE)
    else:
        xb = x.astype(ACT_DTYPE)
    Lh = _cdiv(L + p, stride)
    xb = jnp.pad(xb, ((0, 0), (0, 0), (pad_l, stride * Lh - L - pad_l)))
    if stride > 1:
        # strided conv -> stride-1 conv over phase-split channels (Ci*stride)
        xb = (xb.reshape(B, Ci, Lh, stride).transpose(0, 1, 3, 2)
              .reshape(B, Ci * stride, Lh))
    c2 = Ci * stride
    xin = jnp.pad(xb, ((0, 0), (0, Cip - c2), (0, Lin_p - Lh)))

    grid = (B, nL)
    x_spec = pl.BlockSpec((1, Cip, TL), lambda b, j: (b, 0, j))
    h_spec = pl.BlockSpec((1, Cip, HALO), lambda b, j: (b, 0, (j + 1) * (TL // HALO)))
    w_spec = pl.BlockSpec((ntap, Cop, Cip), lambda b, j: (0, 0, 0))   # resident
    b_spec = pl.BlockSpec((Cop, 1), lambda b, j: (0, 0))
    o_spec = pl.BlockSpec((1, Cop, TL), lambda b, j: (b, 0, j))
    out_shape = jax.ShapeDtypeStruct((B, Cop, nL * TL), ACT_DTYPE)
    cparams = pltpu.CompilerParams(
        dimension_semantics=("parallel", "parallel"),
        vmem_limit_bytes=VMEM_LIMIT)

    if residual is None:
        kernel = functools.partial(_conv_relu_kernel, ntap=ntap)
        out = pl.pallas_call(
            kernel,
            out_shape=out_shape,
            grid_spec=pltpu.PrefetchScalarGridSpec(
                num_scalar_prefetch=0, grid=grid,
                in_specs=[x_spec, h_spec, w_spec, b_spec],
                out_specs=o_spec),
            compiler_params=cparams,
        )(xin, xin, wp, bp)
    else:
        Cr = residual.shape[1]
        assert residual.shape == (B, Cr, Lout), residual.shape
        # channel zero-pad (identity expansion) and lane alignment in one pad
        r = jnp.pad(residual.astype(ACT_DTYPE),
                    ((0, 0), (res_ch_offset, Cop - Cr - res_ch_offset),
                     (0, nL * TL - Lout)))
        r_spec = pl.BlockSpec((1, Cop, TL), lambda b, j: (b, 0, j))
        kernel = functools.partial(_conv_res_kernel, ntap=ntap)
        out = pl.pallas_call(
            kernel,
            out_shape=out_shape,
            grid_spec=pltpu.PrefetchScalarGridSpec(
                num_scalar_prefetch=0, grid=grid,
                in_specs=[x_spec, h_spec, w_spec, b_spec, r_spec],
                out_specs=o_spec),
            compiler_params=cparams,
        )(xin, xin, wp, bp, r)

    return out[:, :c_out, :Lout]


# ----------------------------------------------------------------------------
# Final head wrapper (tiled over length, (B, C) accumulator, no big transpose)
# ----------------------------------------------------------------------------
def final_head_pallas(x, scale, shift, dense_w_t, dense_b):
    """x: (B, C, L).  dense_w_t: (Cp, out) f32 (channel padded).  -> (B, out) f32."""
    B, C, L = x.shape
    Cp, out_dim = dense_w_t.shape
    TL = max(LANE, min(2048, _round_up(L, LANE)))
    nL = _cdiv(L, TL)
    Lp = nL * TL
    xp = jnp.pad(x.astype(ACT_DTYPE), ((0, 0), (0, Cp - C), (0, Lp - L)))
    sp = jnp.pad(scale.astype(jnp.float32), (0, Cp - C)).reshape(Cp, 1)
    tp = jnp.pad(shift.astype(jnp.float32), (0, Cp - C)).reshape(Cp, 1)

    kernel = functools.partial(_head_kernel, inv_len=1.0 / float(L),
                               pad_cols=Lp - L)
    return pl.pallas_call(
        kernel,
        out_shape=jax.ShapeDtypeStruct((B, out_dim), jnp.float32),
        grid_spec=pltpu.PrefetchScalarGridSpec(
            num_scalar_prefetch=0, grid=(nL,),
            in_specs=[pl.BlockSpec((B, Cp, TL), lambda i: (0, 0, i)),
                      pl.BlockSpec((Cp, 1), lambda i: (0, 0)),
                      pl.BlockSpec((Cp, 1), lambda i: (0, 0)),
                      pl.BlockSpec((Cp, out_dim), lambda i: (0, 0)),
                      pl.BlockSpec((1, out_dim), lambda i: (0, 0))],
            out_specs=pl.BlockSpec((B, out_dim), lambda i: (0, 0)),
            scratch_shapes=[pltpu.VMEM((B, Cp), jnp.float32)]),
        compiler_params=pltpu.CompilerParams(
            dimension_semantics=("arbitrary",),
            vmem_limit_bytes=VMEM_LIMIT),
    )(xp, sp, tp, dense_w_t,
      dense_b.reshape(1, out_dim).astype(jnp.float32))


# ----------------------------------------------------------------------------
# MaxPool identity branch (tiny) — plain JAX glue
# ----------------------------------------------------------------------------
def maxpool1d_same(x, kernel_size):
    """MyMaxPool1dPadSame on (B, C, L): zero-pad with the stride=1 padding rule,
    then MaxPool1d(kernel) with stride == kernel."""
    if kernel_size == 1:
        return x
    B, C, L = x.shape
    p = kernel_size - 1
    xp = jnp.pad(x, ((0, 0), (0, 0), (p // 2, p - p // 2)))
    n_out = (L - 1) // kernel_size + 1
    xw = xp[:, :, :n_out * kernel_size].reshape(B, C, n_out, kernel_size)
    return jnp.max(xw, axis=-1)
    # TODO(synk): fold this window-max and the channel zero-pad into the
    # residual conv kernel to save one identity HBM round trip per downsample block.


# ----------------------------------------------------------------------------
# Static block plan (mirrors ResNet1D.__init__ channel/stride logic)
# ----------------------------------------------------------------------------
def _block_plan(cfg):
    plan = []
    for i_block in range(cfg["n_block"]):
        is_first = i_block == 0
        downsample = (i_block % cfg["downsample_gap"] == 1)
        if is_first:
            in_ch = cfg["n_filters_first_layer"]
            out_ch = in_ch
        else:
            in_ch = int(cfg["n_filters_first_layer"] *
                        2 ** ((i_block - 1) // cfg["increasefilter_gap"]))
            if i_block % cfg["increasefilter_gap"] == 0 and i_block != 0:
                out_ch = in_ch * 2
            else:
                out_ch = in_ch
        stride = cfg["stride"] if downsample else 1
        plan.append(dict(in_ch=in_ch, out_ch=out_ch, stride=stride,
                         downsample=downsample, is_first=is_first))
    return plan


# ----------------------------------------------------------------------------
# Parameter init (deterministic, mirrors ResNet1D.__init__ shapes)
# ----------------------------------------------------------------------------
def _init_conv(key, ci, co, k):
    kw, kb = jax.random.split(key)
    w = jax.random.normal(kw, (co, ci, k), jnp.float32) / jnp.sqrt(float(ci * k))
    b = jax.random.normal(kb, (co,), jnp.float32) * 0.05
    return {"w": w, "b": b}


def _init_bn(key, c):
    k1, k2, k3, k4 = jax.random.split(key, 4)
    return {"gamma": jax.random.uniform(k1, (c,), jnp.float32, 0.5, 1.5),
            "beta": jax.random.normal(k2, (c,), jnp.float32) * 0.1,
            "mean": jax.random.normal(k3, (c,), jnp.float32) * 0.1,
            "var": jax.random.uniform(k4, (c,), jnp.float32, 0.5, 1.5)}


def resnet1d_init(key, cfg):
    plan = _block_plan(cfg)
    params = {}
    key, k1, k2 = jax.random.split(key, 3)
    params["first_conv"] = _init_conv(k1, cfg["in_channels"],
                                      cfg["n_filters_first_layer"], cfg["kernel_size"])
    params["first_bn"] = _init_bn(k2, cfg["n_filters_first_layer"])
    blocks = []
    for bp in plan:
        key, ka, kb, kc, kd = jax.random.split(key, 5)
        blocks.append(dict(
            bn1=_init_bn(ka, bp["in_ch"]),
            conv1=_init_conv(kb, bp["in_ch"], bp["out_ch"], cfg["kernel_size"]),
            bn2=_init_bn(kc, bp["out_ch"]),
            conv2=_init_conv(kd, bp["out_ch"], bp["out_ch"], cfg["kernel_size"]),
        ))
    params["blocks"] = blocks
    out_channels = plan[-1]["out_ch"]
    key, kf, kw, kbias = jax.random.split(key, 4)
    params["final_bn"] = _init_bn(kf, out_channels)
    params["dense_w"] = jax.random.normal(
        kw, (cfg["output_dim"], out_channels), jnp.float32) * 0.1
    params["dense_b"] = jax.random.normal(kbias, (cfg["output_dim"],), jnp.float32) * 0.1
    return params


# ----------------------------------------------------------------------------
# One-time parameter preparation: BN folding, stride-phase packing, channel
# padding, bf16 cast of every conv weight (static inference-time work).
# ----------------------------------------------------------------------------
def _fold_conv(w, b, out_bn):
    wf = w.astype(jnp.float32)
    bf = b.astype(jnp.float32)
    if out_bn is not None:
        s, t = out_bn
        wf = wf * s[:, None, None]
        bf = bf * s + t
    return wf, bf


def _pack_conv(wf, bf, stride):
    co, ci, k = wf.shape
    ntap = _cdiv(k, stride)
    kp = ntap * stride
    wp = jnp.pad(wf, ((0, 0), (0, 0), (0, kp - k)))
    wp = (wp.reshape(co, ci, ntap, stride).transpose(2, 0, 1, 3)
          .reshape(ntap, co, ci * stride))
    cip = _round_up(ci * stride, SUBLANE)
    cop = _round_up(co, SUBLANE)
    wp = jnp.pad(wp, ((0, 0), (0, cop - co), (0, cip - ci * stride))).astype(ACT_DTYPE)
    bp = jnp.pad(bf, (0, cop - co)).reshape(cop, 1)
    return wp, bp


def resnet1d_prepare(params, cfg):
    assert cfg.get("groups", 1) == 1  # TODO(synk): grouped conv not implemented
    use_bn = cfg["use_bn"]
    plan = _block_plan(cfg)
    prep = {}

    fbn = bn_scale_shift(**params["first_bn"]) if use_bn else None
    wf, bf = _fold_conv(params["first_conv"]["w"], params["first_conv"]["b"], fbn)
    w0, b0 = _pack_conv(wf, bf, 1)
    prep["first"] = dict(w=w0, b=b0)

    blocks = []
    for bp_plan, blk in zip(plan, params["blocks"]):
        d = {}
        if bp_plan["is_first"]:
            d["in_bn"] = None
        elif use_bn:
            d["in_bn"] = bn_scale_shift(**blk["bn1"])
        else:  # relu1 still applies without BN
            d["in_bn"] = (jnp.ones((bp_plan["in_ch"],), jnp.float32),
                          jnp.zeros((bp_plan["in_ch"],), jnp.float32))
        bn2 = bn_scale_shift(**blk["bn2"]) if use_bn else None
        w1, b1 = _fold_conv(blk["conv1"]["w"], blk["conv1"]["b"], bn2)
        d["conv1_w"], d["conv1_b"] = _pack_conv(w1, b1, bp_plan["stride"])
        w2, b2 = _fold_conv(blk["conv2"]["w"], blk["conv2"]["b"], None)
        d["conv2_w"], d["conv2_b"] = _pack_conv(w2, b2, 1)
        blocks.append(d)
    prep["blocks"] = blocks

    C = plan[-1]["out_ch"]
    if use_bn:
        sf, tf = bn_scale_shift(**params["final_bn"])
    else:
        sf = jnp.ones((C,), jnp.float32)
        tf = jnp.zeros((C,), jnp.float32)
    Cp = _round_up(C, SUBLANE)
    prep["head"] = dict(
        scale=sf, shift=tf,
        w=jnp.pad(params["dense_w"].T.astype(jnp.float32), ((0, Cp - C), (0, 0))),
        b=params["dense_b"].astype(jnp.float32))
    return prep


# ----------------------------------------------------------------------------
# Forward pass (inference: BN uses running stats, Dropout is identity)
# ----------------------------------------------------------------------------
def resnet1d_forward(prepared, x4, cfg):
    # TODO(synk): the original forward indexes x.shape[3] while nn.Conv1d needs
    # 3-D input; we interpret the input as (B, C_in, 1, L) and squeeze dim 2.
    B = x4.shape[0]
    last_dim = x4.shape[3]
    x = x4[:, :, 0, :]                          # (B, Cin, L)
    K = cfg["kernel_size"]
    plan = _block_plan(cfg)

    # first conv + first bn (folded) + relu : one Pallas kernel
    out = conv1d_block_pallas(x, prepared["first"]["w"], prepared["first"]["b"],
                              cfg["n_filters_first_layer"], K, 1)

    for bp_plan, blk in zip(plan, prepared["blocks"]):
        identity = out
        # (bn1 + relu1 fused into glue) + conv1 + bn2 (folded) + relu2
        h = conv1d_block_pallas(out, blk["conv1_w"], blk["conv1_b"],
                                bp_plan["out_ch"], K, bp_plan["stride"],
                                in_bn=blk["in_bn"])
        # identity branch
        if bp_plan["downsample"]:
            identity = maxpool1d_same(identity, bp_plan["stride"])
        ch1 = (bp_plan["out_ch"] - bp_plan["in_ch"]) // 2
        # conv2 (stride 1) + residual add : one Pallas kernel
        out = conv1d_block_pallas(h, blk["conv2_w"], blk["conv2_b"],
                                  bp_plan["out_ch"], K, 1,
                                  residual=identity, res_ch_offset=ch1)

    head = prepared["head"]
    dense_out = final_head_pallas(out, head["scale"], head["shift"],
                                  head["w"], head["b"])
    predictions = dense_out.reshape(B, cfg["prediction_steps"], last_dim)
    return {MODELS_TENSOR_PREDICITONS_KEY: predictions, OTHER_KEY: {}}


# ----------------------------------------------------------------------------
if __name__ == "__main__":
    B, L = 2, 16
    cfg = dict(
        in_channels=4,
        n_filters_first_layer=8,
        kernel_size=3,
        stride=2,
        groups=1,           # only groups=1 implemented
        n_block=5,          # exercises downsample, maxpool identity, channel-pad
        prediction_steps=2,
        downsample_gap=2,
        increasefilter_gap=4,
        use_bn=True,
        use_do=True,        # dropout is identity in inference mode
    )
    # final reshape requires output_dim == prediction_steps * x.shape[3]
    cfg["output_dim"] = cfg["prediction_steps"] * L

    key = jax.random.PRNGKey(0)
    kp, kx = jax.random.split(key)
    params = resnet1d_init(kp, cfg)
    prepared = resnet1d_prepare(params, cfg)
    x = jax.random.normal(kx, (B, cfg["in_channels"], 1, L), dtype=jnp.float32)

    fwd = jax.jit(lambda p, v: resnet1d_forward(p, v, cfg))
    out = fwd(prepared, x)
    preds = jax.block_until_ready(out[MODELS_TENSOR_PREDICITONS_KEY])
    assert preds.shape == (B, cfg["prediction_steps"], L), preds.shape
    assert bool(jnp.all(jnp.isfinite(preds)))
    print("KERNEL_OK")
</pallas_src>

<mosaic_0001>
module attributes {stable_mosaic.version = 11 : i64} {
  func.func @_conv_relu_kernel(%arg0: i32, %arg1: i32, %arg2: memref<1x16x128xbf16, #tpu.memory_space<vmem>>, %arg3: memref<1x16x128xbf16, #tpu.memory_space<vmem>>, %arg4: memref<3x16x16xbf16, #tpu.memory_space<vmem>>, %arg5: memref<16x1xf32, #tpu.memory_space<vmem>>, %arg6: memref<1x16x128xbf16, #tpu.memory_space<vmem>>) attributes {dimension_semantics = [#tpu.dimension_semantics<parallel>, #tpu.dimension_semantics<parallel>], iteration_bounds = array<i64: 2, 1>, scalar_prefetch = 0 : i64, scratch_operands = 0 : i64, tpu.core_type = #tpu.core_type<tc>, window_params = [{transform_indices = @transform_0, window_bounds = array<i64: 1, 16, 128>}, {transform_indices = @transform_1, window_bounds = array<i64: 1, 16, 128>}, {pipeline_mode = #tpu.pipeline_mode<synchronous>, transform_indices = @transform_2, window_bounds = array<i64: 3, 16, 16>}, {pipeline_mode = #tpu.pipeline_mode<synchronous>, transform_indices = @transform_3, window_bounds = array<i64: 16, 1>}, {transform_indices = @transform_4, window_bounds = array<i64: 1, 16, 128>}]} {
    %c0 = arith.constant 0 : index
    %c0_0 = arith.constant 0 : index
    %c0_1 = arith.constant 0 : index
    %0 = vector.load %arg2[%c0, %c0_0, %c0_1] : memref<1x16x128xbf16, #tpu.memory_space<vmem>>, vector<1x16x128xbf16>
    %1 = vector.shape_cast %0 : vector<1x16x128xbf16> to vector<16x128xbf16>
    %c0_2 = arith.constant 0 : index
    %c0_3 = arith.constant 0 : index
    %c0_4 = arith.constant 0 : index
    %2 = vector.load %arg4[%c0_2, %c0_3, %c0_4] : memref<3x16x16xbf16, #tpu.memory_space<vmem>>, vector<1x16x16xbf16>
    %3 = vector.shape_cast %2 : vector<1x16x16xbf16> to vector<16x16xbf16>
    %cst = arith.constant dense<0.000000e+00> : vector<16x128xf32>
    %4 = tpu.matmul %3, %1, %cst {dimension_numbers = #tpu.dot_dimension_numbers<[1], [0], [0], [1], [0, 0, 1, 1], [], []>} : vector<16x16xbf16>, vector<16x128xbf16>, vector<16x128xf32> -> vector<16x128xf32>
    %c0_5 = arith.constant 0 : index
    %c0_6 = arith.constant 0 : index
    %c0_7 = arith.constant 0 : index
    %5 = vector.load %arg3[%c0_5, %c0_6, %c0_7] : memref<1x16x128xbf16, #tpu.memory_space<vmem>>, vector<1x16x128xbf16>
    %6 = vector.shape_cast %5 : vector<1x16x128xbf16> to vector<16x128xbf16>
    %7 = tpu.concatenate %1, %6 in 1 : vector<16x128xbf16>, vector<16x128xbf16> -> vector<16x256xbf16>
    %c1 = arith.constant 1 : index
    %c0_8 = arith.constant 0 : index
    %c0_9 = arith.constant 0 : index
    %8 = vector.load %arg4[%c1, %c0_8, %c0_9] : memref<3x16x16xbf16, #tpu.memory_space<vmem>>, vector<1x16x16xbf16>
    %9 = vector.shape_cast %8 : vector<1x16x16xbf16> to vector<16x16xbf16>
    %10 = vector.extract_strided_slice %7 {offsets = [0, 1], sizes = [16, 128], strides = [1, 1]} : vector<16x256xbf16> to vector<16x128xbf16>
    %cst_10 = arith.constant dense<0.000000e+00> : vector<16x128xf32>
    %11 = tpu.matmul %9, %10, %cst_10 {dimension_numbers = #tpu.dot_dimension_numbers<[1], [0], [0], [1], [0, 0, 1, 1], [], []>} : vector<16x16xbf16>, vector<16x128xbf16>, vector<16x128xf32> -> vector<16x128xf32>
    %12 = arith.addf %4, %11 : vector<16x128xf32>
    %c2 = arith.constant 2 : index
    %c0_11 = arith.constant 0 : index
    %c0_12 = arith.constant 0 : index
    %13 = vector.load %arg4[%c2, %c0_11, %c0_12] : memref<3x16x16xbf16, #tpu.memory_space<vmem>>, vector<1x16x16xbf16>
    %14 = vector.shape_cast %13 : vector<1x16x16xbf16> to vector<16x16xbf16>
    %15 = vector.extract_strided_slice %7 {offsets = [0, 2], sizes = [16, 128], strides = [1, 1]} : vector<16x256xbf16> to vector<16x128xbf16>
    %cst_13 = arith.constant dense<0.000000e+00> : vector<16x128xf32>
    %16 = tpu.matmul %14, %15, %cst_13 {dimension_numbers = #tpu.dot_dimension_numbers<[1], [0], [0], [1], [0, 0, 1, 1], [], []>} : vector<16x16xbf16>, vector<16x128xbf16>, vector<16x128xf32> -> vector<16x128xf32>
    %17 = arith.addf %12, %16 : vector<16x128xf32>
    %c0_14 = arith.constant 0 : index
    %c0_15 = arith.constant 0 : index
    %18 = vector.load %arg5[%c0_14, %c0_15] : memref<16x1xf32, #tpu.memory_space<vmem>>, vector<16x1xf32>
    %19 = vector.broadcast %18 : vector<16x1xf32> to vector<16x128xf32>
    %20 = arith.addf %17, %19 : vector<16x128xf32>
    %cst_16 = arith.constant 0.000000e+00 : f32
    %21 = vector.broadcast %cst_16 : f32 to vector<16x128xf32>
    %22 = arith.maximumf %20, %21 : vector<16x128xf32>
    %23 = arith.truncf %22 : vector<16x128xf32> to vector<16x128xbf16>
    %c0_17 = arith.constant 0 : index
    %c0_18 = arith.constant 0 : index
    %c0_19 = arith.constant 0 : index
    %24 = vector.load %arg6[%c0_17, %c0_18, %c0_19] : memref<1x16x128xbf16, #tpu.memory_space<vmem>>, vector<1x16x128xbf16>
    %25 = vector.shape_cast %24 : vector<1x16x128xbf16> to vector<16x128xbf16>
    %26 = vector.shape_cast %23 : vector<16x128xbf16> to vector<1x16x128xbf16>
    tpu.vector_store %arg6[%c0_17, %c0_18, %c0_19], %26 {strides = array<i32>} : memref<1x16x128xbf16, #tpu.memory_space<vmem>>, vector<1x16x128xbf16>,
    return
  }
  func.func @transform_0(%arg0: i32, %arg1: i32) -> (i32, i32, i32) {
    %c0_i32 = arith.constant 0 : i32
    %c0_i32_0 = arith.constant 0 : i32
    return %arg0, %c0_i32, %arg1 : i32, i32, i32
  }
  func.func @transform_1(%arg0: i32, %arg1: i32) -> (i32, i32, i32) {
    %c1_i32 = arith.constant 1 : i32
    %0 = arith.addi %arg1, %c1_i32 : i32
    %c1_i32_0 = arith.constant 1 : i32
    %1 = arith.muli %0, %c1_i32_0 : i32
    %c0_i32 = arith.constant 0 : i32
    %c0_i32_1 = arith.constant 0 : i32
    return %arg0, %c0_i32, %1 : i32, i32, i32
  }
  func.func @transform_2(%arg0: i32, %arg1: i32) -> (i32, i32, i32) {
    %c0_i32 = arith.constant 0 : i32
    %c0_i32_0 = arith.constant 0 : i32
    %c0_i32_1 = arith.constant 0 : i32
    %c0_i32_2 = arith.constant 0 : i32
    return %c0_i32, %c0_i32_0, %c0_i32_1 : i32, i32, i32
  }
  func.func @transform_3(%arg0: i32, %arg1: i32) -> (i32, i32) {
    %c0_i32 = arith.constant 0 : i32
    %c0_i32_0 = arith.constant 0 : i32
    %c0_i32_1 = arith.constant 0 : i32
    return %c0_i32, %c0_i32_0 : i32, i32
  }
  func.func @transform_4(%arg0: i32, %arg1: i32) -> (i32, i32, i32) {
    %c0_i32 = arith.constant 0 : i32
    %c0_i32_0 = arith.constant 0 : i32
    return %arg0, %c0_i32, %arg1 : i32, i32, i32
  }
}

module attributes {stable_mosaic.version = 11 : i64} {
  func.func @_conv_res_kernel(%arg0: i32, %arg1: i32, %arg2: memref<1x16x128xbf16, #tpu.memory_space<vmem>>, %arg3: memref<1x16x128xbf16, #tpu.memory_space<vmem>>, %arg4: memref<3x16x16xbf16, #tpu.memory_space<vmem>>, %arg5: memref<16x1xf32, #tpu.memory_space<vmem>>, %arg6: memref<1x16x128xbf16, #tpu.memory_space<vmem>>, %arg7: memref<1x16x128xbf16, #tpu.memory_space<vmem>>) attributes {dimension_semantics = [#tpu.dimension_semantics<parallel>, #tpu.dimension_semantics<parallel>], iteration_bounds = array<i64: 2, 1>, scalar_prefetch = 0 : i64, scratch_operands = 0 : i64, tpu.core_type = #tpu.core_type<tc>, window_params = [{transform_indices = @transform_0, window_bounds = array<i64: 1, 16, 128>}, {transform_indices = @transform_1, window_bounds = array<i64: 1, 16, 128>}, {pipeline_mode = #tpu.pipeline_mode<synchronous>, transform_indices = @transform_2, window_bounds = array<i64: 3, 16, 16>}, {pipeline_mode = #tpu.pipeline_mode<synchronous>, transform_indices = @transform_3, window_bounds = array<i64: 16, 1>}, {transform_indices = @transform_4, window_bounds = array<i64: 1, 16, 128>}, {transform_indices = @transform_5, window_bounds = array<i64: 1, 16, 128>}]} {
    %c0 = arith.constant 0 : index
    %c0_0 = arith.constant 0 : index
    %c0_1 = arith.constant 0 : index
    %0 = vector.load %arg2[%c0, %c0_0, %c0_1] : memref<1x16x128xbf16, #tpu.memory_space<vmem>>, vector<1x16x128xbf16>
    %1 = vector.shape_cast %0 : vector<1x16x128xbf16> to vector<16x128xbf16>
    %c0_2 = arith.constant 0 : index
    %c0_3 = arith.constant 0 : index
    %c0_4 = arith.constant 0 : index
    %2 = vector.load %arg4[%c0_2, %c0_3, %c0_4] : memref<3x16x16xbf16, #tpu.memory_space<vmem>>, vector<1x16x16xbf16>
    %3 = vector.shape_cast %2 : vector<1x16x16xbf16> to vector<16x16xbf16>
    %cst = arith.constant dense<0.000000e+00> : vector<16x128xf32>
    %4 = tpu.matmul %3, %1, %cst {dimension_numbers = #tpu.dot_dimension_numbers<[1], [0], [0], [1], [0, 0, 1, 1], [], []>} : vector<16x16xbf16>, vector<16x128xbf16>, vector<16x128xf32> -> vector<16x128xf32>
    %c0_5 = arith.constant 0 : index
    %c0_6 = arith.constant 0 : index
    %c0_7 = arith.constant 0 : index
    %5 = vector.load %arg3[%c0_5, %c0_6, %c0_7] : memref<1x16x128xbf16, #tpu.memory_space<vmem>>, vector<1x16x128xbf16>
    %6 = vector.shape_cast %5 : vector<1x16x128xbf16> to vector<16x128xbf16>
    %7 = tpu.concatenate %1, %6 in 1 : vector<16x128xbf16>, vector<16x128xbf16> -> vector<16x256xbf16>
    %c1 = arith.constant 1 : index
    %c0_8 = arith.constant 0 : index
    %c0_9 = arith.constant 0 : index
    %8 = vector.load %arg4[%c1, %c0_8, %c0_9] : memref<3x16x16xbf16, #tpu.memory_space<vmem>>, vector<1x16x16xbf16>
    %9 = vector.shape_cast %8 : vector<1x16x16xbf16> to vector<16x16xbf16>
    %10 = vector.extract_strided_slice %7 {offsets = [0, 1], sizes = [16, 128], strides = [1, 1]} : vector<16x256xbf16> to vector<16x128xbf16>
    %cst_10 = arith.constant dense<0.000000e+00> : vector<16x128xf32>
    %11 = tpu.matmul %9, %10, %cst_10 {dimension_numbers = #tpu.dot_dimension_numbers<[1], [0], [0], [1], [0, 0, 1, 1], [], []>} : vector<16x16xbf16>, vector<16x128xbf16>, vector<16x128xf32> -> vector<16x128xf32>
    %12 = arith.addf %4, %11 : vector<16x128xf32>
    %c2 = arith.constant 2 : index
    %c0_11 = arith.constant 0 : index
    %c0_12 = arith.constant 0 : index
    %13 = vector.load %arg4[%c2, %c0_11, %c0_12] : memref<3x16x16xbf16, #tpu.memory_space<vmem>>, vector<1x16x16xbf16>
    %14 = vector.shape_cast %13 : vector<1x16x16xbf16> to vector<16x16xbf16>
    %15 = vector.extract_strided_slice %7 {offsets = [0, 2], sizes = [16, 128], strides = [1, 1]} : vector<16x256xbf16> to vector<16x128xbf16>
    %cst_13 = arith.constant dense<0.000000e+00> : vector<16x128xf32>
    %16 = tpu.matmul %14, %15, %cst_13 {dimension_numbers = #tpu.dot_dimension_numbers<[1], [0], [0], [1], [0, 0, 1, 1], [], []>} : vector<16x16xbf16>, vector<16x128xbf16>, vector<16x128xf32> -> vector<16x128xf32>
    %17 = arith.addf %12, %16 : vector<16x128xf32>
    %c0_14 = arith.constant 0 : index
    %c0_15 = arith.constant 0 : index
    %18 = vector.load %arg5[%c0_14, %c0_15] : memref<16x1xf32, #tpu.memory_space<vmem>>, vector<16x1xf32>
    %19 = vector.broadcast %18 : vector<16x1xf32> to vector<16x128xf32>
    %20 = arith.addf %17, %19 : vector<16x128xf32>
    %c0_16 = arith.constant 0 : index
    %c0_17 = arith.constant 0 : index
    %c0_18 = arith.constant 0 : index
    %21 = vector.load %arg6[%c0_16, %c0_17, %c0_18] : memref<1x16x128xbf16, #tpu.memory_space<vmem>>, vector<1x16x128xbf16>
    %22 = vector.shape_cast %21 : vector<1x16x128xbf16> to vector<16x128xbf16>
    %23 = arith.extf %22 : vector<16x128xbf16> to vector<16x128xf32>
    %24 = arith.addf %20, %23 : vector<16x128xf32>
    %25 = arith.truncf %24 : vector<16x128xf32> to vector<16x128xbf16>
    %c0_19 = arith.constant 0 : index
    %c0_20 = arith.constant 0 : index
    %c0_21 = arith.constant 0 : index
    %26 = vector.load %arg7[%c0_19, %c0_20, %c0_21] : memref<1x16x128xbf16, #tpu.memory_space<vmem>>, vector<1x16x128xbf16>
    %27 = vector.shape_cast %26 : vector<1x16x128xbf16> to vector<16x128xbf16>
    %28 = vector.shape_cast %25 : vector<16x128xbf16> to vector<1x16x128xbf16>
    tpu.vector_store %arg7[%c0_19, %c0_20, %c0_21], %28 {strides = array<i32>} : memref<1x16x128xbf16, #tpu.memory_space<vmem>>, vector<1x16x128xbf16>,
    return
  }
  func.func @transform_0(%arg0: i32, %arg1: i32) -> (i32, i32, i32) {
    %c0_i32 = arith.constant 0 : i32
    %c0_i32_0 = arith.constant 0 : i32
    return %arg0, %c0_i32, %arg1 : i32, i32, i32
  }
  func.func @transform_1(%arg0: i32, %arg1: i32) -> (i32, i32, i32) {
    %c1_i32 = arith.constant 1 : i32
    %0 = arith.addi %arg1, %c1_i32 : i32
    %c1_i32_0 = arith.constant 1 : i32
    %1 = arith.muli %0, %c1_i32_0 : i32
    %c0_i32 = arith.constant 0 : i32
    %c0_i32_1 = arith.constant 0 : i32
    return %arg0, %c0_i32, %1 : i32, i32, i32
  }
  func.func @transform_2(%arg0: i32, %arg1: i32) -> (i32, i32, i32) {
    %c0_i32 = arith.constant 0 : i32
    %c0_i32_0 = arith.constant 0 : i32
    %c0_i32_1 = arith.constant 0 : i32
    %c0_i32_2 = arith.constant 0 : i32
    return %c0_i32, %c0_i32_0, %c0_i32_1 : i32, i32, i32
  }
  func.func @transform_3(%arg0: i32, %arg1: i32) -> (i32, i32) {
    %c0_i32 = arith.constant 0 : i32
    %c0_i32_0 = arith.constant 0 : i32
    %c0_i32_1 = arith.constant 0 : i32
    return %c0_i32, %c0_i32_0 : i32, i32
  }
  func.func @transform_4(%arg0: i32, %arg1: i32) -> (i32, i32, i32) {
    %c0_i32 = arith.constant 0 : i32
    %c0_i32_0 = arith.constant 0 : i32
    return %arg0, %c0_i32, %arg1 : i32, i32, i32
  }
  func.func @transform_5(%arg0: i32, %arg1: i32) -> (i32, i32, i32) {
    %c0_i32 = arith.constant 0 : i32
    %c0_i32_0 = arith.constant 0 : i32
    return %arg0, %c0_i32, %arg1 : i32, i32, i32
  }
}

module attributes {stable_mosaic.version = 11 : i64} {
  func.func @_conv_relu_kernel(%arg0: i32, %arg1: i32, %arg2: memref<1x16x128xbf16, #tpu.memory_space<vmem>>, %arg3: memref<1x16x128xbf16, #tpu.memory_space<vmem>>, %arg4: memref<2x16x16xbf16, #tpu.memory_space<vmem>>, %arg5: memref<16x1xf32, #tpu.memory_space<vmem>>, %arg6: memref<1x16x128xbf16, #tpu.memory_space<vmem>>) attributes {dimension_semantics = [#tpu.dimension_semantics<parallel>, #tpu.dimension_semantics<parallel>], iteration_bounds = array<i64: 2, 1>, scalar_prefetch = 0 : i64, scratch_operands = 0 : i64, tpu.core_type = #tpu.core_type<tc>, window_params = [{transform_indices = @transform_0, window_bounds = array<i64: 1, 16, 128>}, {transform_indices = @transform_1, window_bounds = array<i64: 1, 16, 128>}, {pipeline_mode = #tpu.pipeline_mode<synchronous>, transform_indices = @transform_2, window_bounds = array<i64: 2, 16, 16>}, {pipeline_mode = #tpu.pipeline_mode<synchronous>, transform_indices = @transform_3, window_bounds = array<i64: 16, 1>}, {transform_indices = @transform_4, window_bounds = array<i64: 1, 16, 128>}]} {
    %c0 = arith.constant 0 : index
    %c0_0 = arith.constant 0 : index
    %c0_1 = arith.constant 0 : index
    %0 = vector.load %arg2[%c0, %c0_0, %c0_1] : memref<1x16x128xbf16, #tpu.memory_space<vmem>>, vector<1x16x128xbf16>
    %1 = vector.shape_cast %0 : vector<1x16x128xbf16> to vector<16x128xbf16>
    %c0_2 = arith.constant 0 : index
    %c0_3 = arith.constant 0 : index
    %c0_4 = arith.constant 0 : index
    %2 = vector.load %arg4[%c0_2, %c0_3, %c0_4] : memref<2x16x16xbf16, #tpu.memory_space<vmem>>, vector<1x16x16xbf16>
    %3 = vector.shape_cast %2 : vector<1x16x16xbf16> to vector<16x16xbf16>
    %cst = arith.constant dense<0.000000e+00> : vector<16x128xf32>
    %4 = tpu.matmul %3, %1, %cst {dimension_numbers = #tpu.dot_dimension_numbers<[1], [0], [0], [1], [0, 0, 1, 1], [], []>} : vector<16x16xbf16>, vector<16x128xbf16>, vector<16x128xf32> -> vector<16x128xf32>
    %c0_5 = arith.constant 0 : index
    %c0_6 = arith.constant 0 : index
    %c0_7 = arith.constant 0 : index
    %5 = vector.load %arg3[%c0_5, %c0_6, %c0_7] : memref<1x16x128xbf16, #tpu.memory_space<vmem>>, vector<1x16x128xbf16>
    %6 = vector.shape_cast %5 : vector<1x16x128xbf16> to vector<16x128xbf16>
    %7 = tpu.concatenate %1, %6 in 1 : vector<16x128xbf16>, vector<16x128xbf16> -> vector<16x256xbf16>
    %c1 = arith.constant 1 : index
    %c0_8 = arith.constant 0 : index
    %c0_9 = arith.constant 0 : index
    %8 = vector.load %arg4[%c1, %c0_8, %c0_9] : memref<2x16x16xbf16, #tpu.memory_space<vmem>>, vector<1x16x16xbf16>
    %9 = vector.shape_cast %8 : vector<1x16x16xbf16> to vector<16x16xbf16>
    %10 = vector.extract_strided_slice %7 {offsets = [0, 1], sizes = [16, 128], strides = [1, 1]} : vector<16x256xbf16> to vector<16x128xbf16>
    %cst_10 = arith.constant dense<0.000000e+00> : vector<16x128xf32>
    %11 = tpu.matmul %9, %10, %cst_10 {dimension_numbers = #tpu.dot_dimension_numbers<[1], [0], [0], [1], [0, 0, 1, 1], [], []>} : vector<16x16xbf16>, vector<16x128xbf16>, vector<16x128xf32> -> vector<16x128xf32>
    %12 = arith.addf %4, %11 : vector<16x128xf32>
    %c0_11 = arith.constant 0 : index
    %c0_12 = arith.constant 0 : index
    %13 = vector.load %arg5[%c0_11, %c0_12] : memref<16x1xf32, #tpu.memory_space<vmem>>, vector<16x1xf32>
    %14 = vector.broadcast %13 : vector<16x1xf32> to vector<16x128xf32>
    %15 = arith.addf %12, %14 : vector<16x128xf32>
    %cst_13 = arith.constant 0.000000e+00 : f32
    %16 = vector.broadcast %cst_13 : f32 to vector<16x128xf32>
    %17 = arith.maximumf %15, %16 : vector<16x128xf32>
    %18 = arith.truncf %17 : vector<16x128xf32> to vector<16x128xbf16>
    %c0_14 = arith.constant 0 : index
    %c0_15 = arith.constant 0 : index
    %c0_16 = arith.constant 0 : index
    %19 = vector.load %arg6[%c0_14, %c0_15, %c0_16] : memref<1x16x128xbf16, #tpu.memory_space<vmem>>, vector<1x16x128xbf16>
    %20 = vector.shape_cast %19 : vector<1x16x128xbf16> to vector<16x128xbf16>
    %21 = vector.shape_cast %18 : vector<16x128xbf16> to vector<1x16x128xbf16>
    tpu.vector_store %arg6[%c0_14, %c0_15, %c0_16], %21 {strides = array<i32>} : memref<1x16x128xbf16, #tpu.memory_space<vmem>>, vector<1x16x128xbf16>,
    return
  }
  func.func @transform_0(%arg0: i32, %arg1: i32) -> (i32, i32, i32) {
    %c0_i32 = arith.constant 0 : i32
    %c0_i32_0 = arith.constant 0 : i32
    return %arg0, %c0_i32, %arg1 : i32, i32, i32
  }
  func.func @transform_1(%arg0: i32, %arg1: i32) -> (i32, i32, i32) {
    %c1_i32 = arith.constant 1 : i32
    %0 = arith.addi %arg1, %c1_i32 : i32
    %c1_i32_0 = arith.constant 1 : i32
    %1 = arith.muli %0, %c1_i32_0 : i32
    %c0_i32 = arith.constant 0 : i32
    %c0_i32_1 = arith.constant 0 : i32
    return %arg0, %c0_i32, %1 : i32, i32, i32
  }
  func.func @transform_2(%arg0: i32, %arg1: i32) -> (i32, i32, i32) {
    %c0_i32 = arith.constant 0 : i32
    %c0_i32_0 = arith.constant 0 : i32
    %c0_i32_1 = arith.constant 0 : i32
    %c0_i32_2 = arith.constant 0 : i32
    return %c0_i32, %c0_i32_0, %c0_i32_1 : i32, i32, i32
  }
  func.func @transform_3(%arg0: i32, %arg1: i32) -> (i32, i32) {
    %c0_i32 = arith.constant 0 : i32
    %c0_i32_0 = arith.constant 0 : i32
    %c0_i32_1 = arith.constant 0 : i32
    return %c0_i32, %c0_i32_0 : i32, i32
  }
  func.func @transform_4(%arg0: i32, %arg1: i32) -> (i32, i32, i32) {
    %c0_i32 = arith.constant 0 : i32
    %c0_i32_0 = arith.constant 0 : i32
    return %arg0, %c0_i32, %arg1 : i32, i32, i32
  }
}

module attributes {stable_mosaic.version = 11 : i64} {
  func.func @_head_kernel(%arg0: i32, %arg1: memref<2x16x128xbf16, #tpu.memory_space<vmem>>, %arg2: memref<16x1xf32, #tpu.memory_space<vmem>>, %arg3: memref<16x1xf32, #tpu.memory_space<vmem>>, %arg4: memref<16x32xf32, #tpu.memory_space<vmem>>, %arg5: memref<1x32xf32, #tpu.memory_space<vmem>>, %arg6: memref<2x32xf32, #tpu.memory_space<vmem>>, %arg7: memref<2x16xf32, #tpu.memory_space<vmem>>) attributes {dimension_semantics = [#tpu.dimension_semantics<arbitrary>], iteration_bounds = array<i64: 1>, scalar_prefetch = 0 : i64, scratch_operands = 1 : i64, tpu.core_type = #tpu.core_type<tc>, window_params = [{transform_indices = @transform_0, window_bounds = array<i64: 2, 16, 128>}, {pipeline_mode = #tpu.pipeline_mode<synchronous>, transform_indices = @transform_1, window_bounds = array<i64: 16, 1>}, {pipeline_mode = #tpu.pipeline_mode<synchronous>, transform_indices = @transform_2, window_bounds = array<i64: 16, 1>}, {pipeline_mode = #tpu.pipeline_mode<synchronous>, transform_indices = @transform_3, window_bounds = array<i64: 16, 32>}, {pipeline_mode = #tpu.pipeline_mode<synchronous>, transform_indices = @transform_4, window_bounds = array<i64: 1, 32>}, {pipeline_mode = #tpu.pipeline_mode<synchronous>, transform_indices = @transform_5, window_bounds = array<i64: 2, 32>}]} {
    %c0_i32 = arith.constant 0 : i32
    %0 = arith.cmpi eq, %arg0, %c0_i32 : i32
    %1 = arith.extui %0 : i1 to i32
    %c0_i32_0 = arith.constant 0 : i32
    %2 = arith.cmpi ne, %1, %c0_i32_0 : i32
    scf.if %2 {
      %cst_14 = arith.constant 0.000000e+00 : f32
      %22 = vector.broadcast %cst_14 : f32 to vector<2x16xf32>
      %c0_15 = arith.constant 0 : index
      %c0_16 = arith.constant 0 : index
      %23 = vector.load %arg7[%c0_15, %c0_16] : memref<2x16xf32, #tpu.memory_space<vmem>>, vector<2x16xf32>
      tpu.vector_store %arg7[%c0_15, %c0_16], %22 {strides = array<i32>} : memref<2x16xf32, #tpu.memory_space<vmem>>, vector<2x16xf32>,
    } else {
    }
    %c0 = arith.constant 0 : index
    %c0_1 = arith.constant 0 : index
    %3 = vector.load %arg2[%c0, %c0_1] : memref<16x1xf32, #tpu.memory_space<vmem>>, vector<16x1xf32>
    %4 = vector.shape_cast %3 : vector<16x1xf32> to vector<1x16x1xf32>
    %c0_2 = arith.constant 0 : index
    %c0_3 = arith.constant 0 : index
    %5 = vector.load %arg3[%c0_2, %c0_3] : memref<16x1xf32, #tpu.memory_space<vmem>>, vector<16x1xf32>
    %6 = vector.shape_cast %5 : vector<16x1xf32> to vector<1x16x1xf32>
    %c0_4 = arith.constant 0 : index
    %c0_5 = arith.constant 0 : index
    %c0_6 = arith.constant 0 : index
    %7 = vector.load %arg1[%c0_4, %c0_5, %c0_6] : memref<2x16x128xbf16, #tpu.memory_space<vmem>>, vector<2x16x128xbf16>
    %8 = arith.extf %7 : vector<2x16x128xbf16> to vector<2x16x128xf32>
    %9 = vector.broadcast %4 : vector<1x16x1xf32> to vector<2x16x128xf32>
    %10 = arith.mulf %8, %9 : vector<2x16x128xf32>
    %11 = vector.broadcast %6 : vector<1x16x1xf32> to vector<2x16x128xf32>
    %12 = arith.addf %10, %11 : vector<2x16x128xf32>
    %cst = arith.constant 0.000000e+00 : f32
    %13 = vector.broadcast %cst : f32 to vector<2x16x128xf32>
    %14 = arith.maximumf %12, %13 : vector<2x16x128xf32>
    %c0_7 = arith.constant 0 : index
    %c0_8 = arith.constant 0 : index
    %15 = vector.load %arg7[%c0_7, %c0_8] : memref<2x16xf32, #tpu.memory_space<vmem>>, vector<2x16xf32>
    %cst_9 = arith.constant dense<0.000000e+00> : vector<2x16xf32>
    %16 = vector.multi_reduction <add>, %14, %cst_9 [2] : vector<2x16x128xf32> to vector<2x16xf32>
    %17 = arith.addf %15, %16 : vector<2x16xf32>
    %c0_10 = arith.constant 0 : index
    %c0_11 = arith.constant 0 : index
    %18 = vector.load %arg7[%c0_10, %c0_11] : memref<2x16xf32, #tpu.memory_space<vmem>>, vector<2x16xf32>
    tpu.vector_store %arg7[%c0_10, %c0_11], %17 {strides = array<i32>} : memref<2x16xf32, #tpu.memory_space<vmem>>, vector<2x16xf32>,
    %c0_i32_12 = arith.constant 0 : i32
    %19 = arith.cmpi eq, %arg0, %c0_i32_12 : i32
    %20 = arith.extui %19 : i1 to i32
    %c0_i32_13 = arith.constant 0 : i32
    %21 = arith.cmpi ne, %20, %c0_i32_13 : i32
    scf.if %21 {
      %c0_14 = arith.constant 0 : index
      %c0_15 = arith.constant 0 : index
      %22 = vector.load %arg3[%c0_14, %c0_15] : memref<16x1xf32, #tpu.memory_space<vmem>>, vector<16x1xf32>
      %cst_16 = arith.constant 0.000000e+00 : f32
      %23 = vector.broadcast %cst_16 : f32 to vector<16x1xf32>
      %24 = arith.maximumf %22, %23 : vector<16x1xf32>
      %25 = vector.shape_cast %24 : vector<16x1xf32> to vector<1x16xf32>
      %cst_17 = arith.constant 1.240000e+02 : f32
      %26 = vector.broadcast %cst_17 : f32 to vector<1x16xf32>
      %27 = arith.mulf %26, %25 : vector<1x16xf32>
      %c0_18 = arith.constant 0 : index
      %c0_19 = arith.constant 0 : index
      %28 = vector.load %arg7[%c0_18, %c0_19] : memref<2x16xf32, #tpu.memory_space<vmem>>, vector<2x16xf32>
      %29 = vector.broadcast %27 : vector<1x16xf32> to vector<2x16xf32>
      %30 = arith.subf %28, %29 : vector<2x16xf32>
      %cst_20 = arith.constant 2.500000e-01 : f32
      %31 = vector.broadcast %cst_20 : f32 to vector<2x16xf32>
      %32 = arith.mulf %30, %31 : vector<2x16xf32>
      %c0_21 = arith.constant 0 : index
      %c0_22 = arith.constant 0 : index
      %33 = vector.load %arg4[%c0_21, %c0_22] : memref<16x32xf32, #tpu.memory_space<vmem>>, vector<16x32xf32>
      %cst_23 = arith.constant dense<0.000000e+00> : vector<2x32xf32>
      %34 = tpu.matmul %32, %33, %cst_23 {dimension_numbers = #tpu.dot_dimension_numbers<[1], [0], [0], [1], [0, 0, 1, 1], [], []>} : vector<2x16xf32>, vector<16x32xf32>, vector<2x32xf32> -> vector<2x32xf32>
      %c0_24 = arith.constant 0 : index
      %c0_25 = arith.constant 0 : index
      %35 = vector.load %arg5[%c0_24, %c0_25] : memref<1x32xf32, #tpu.memory_space<vmem>>, vector<1x32xf32>
      %36 = vector.broadcast %35 : vector<1x32xf32> to vector<2x32xf32>
      %37 = arith.addf %34, %36 : vector<2x32xf32>
      %c0_26 = arith.constant 0 : index
      %c0_27 = arith.constant 0 : index
      %38 = vector.load %arg6[%c0_26, %c0_27] : memref<2x32xf32, #tpu.memory_space<vmem>>, vector<2x32xf32>
      tpu.vector_store %arg6[%c0_26, %c0_27], %37 {strides = array<i32>} : memref<2x32xf32, #tpu.memory_space<vmem>>, vector<2x32xf32>,
    } else {
    }
    return
  }
  func.func @transform_0(%arg0: i32) -> (i32, i32, i32) {
    %c0_i32 = arith.constant 0 : i32
    %c0_i32_0 = arith.constant 0 : i32
    %c0_i32_1 = arith.constant 0 : i32
    return %c0_i32, %c0_i32_0, %arg0 : i32, i32, i32
  }
  func.func @transform_1(%arg0: i32) -> (i32, i32) {
    %c0_i32 = arith.constant 0 : i32
    %c0_i32_0 = arith.constant 0 : i32
    %c0_i32_1 = arith.constant 0 : i32
    return %c0_i32, %c0_i32_0 : i32, i32
  }
  func.func @transform_2(%arg0: i32) -> (i32, i32) {
    %c0_i32 = arith.constant 0 : i32
    %c0_i32_0 = arith.constant 0 : i32
    %c0_i32_1 = arith.constant 0 : i32
    return %c0_i32, %c0_i32_0 : i32, i32
  }
  func.func @transform_3(%arg0: i32) -> (i32, i32) {
    %c0_i32 = arith.constant 0 : i32
    %c0_i32_0 = arith.constant 0 : i32
    %c0_i32_1 = arith.constant 0 : i32
    return %c0_i32, %c0_i32_0 : i32, i32
  }
  func.func @transform_4(%arg0: i32) -> (i32, i32) {
    %c0_i32 = arith.constant 0 : i32
    %c0_i32_0 = arith.constant 0 : i32
    %c0_i32_1 = arith.constant 0 : i32
    return %c0_i32, %c0_i32_0 : i32, i32
  }
  func.func @transform_5(%arg0: i32) -> (i32, i32) {
    %c0_i32 = arith.constant 0 : i32
    %c0_i32_0 = arith.constant 0 : i32
    %c0_i32_1 = arith.constant 0 : i32
    return %c0_i32, %c0_i32_0 : i32, i32
  }
}

</mosaic_0001>

<llo_original>
// kernel: _lambda_.12
$region0: #{_lambda_.12}
  #allocation0 [shape = 'u32[]', space=smem, size = 0x4, offset = 0x4, fixed_abs, tag = 'smem constant byte address 0x4 - core index']
  #allocation1 [shape = 'u32[144,128]{1,0:T(1,128)}', space=vmem, size = 0x12000, scoped, tag = 'internal scratch']
  %s0 = inlined_call_operand.vmem [shape: bf16[2,16,256], index: 0, kind: input, shape index: {}, may-alias: {0,1}]
  %s1 = inlined_call_operand.vmem [shape: bf16[2,16,256], index: 1, kind: input, shape index: {}, may-alias: {0,1}]
  %s2 = inlined_call_operand.vmem [shape: bf16[3,16,16], index: 2, kind: input, shape index: {}]
  %s3 = inlined_call_operand.vmem [shape: f32[16,1], index: 3, kind: input, shape index: {}]
  %s4 = inlined_call_operand.vmem [shape: bf16[2,16,128], index: 4, kind: output, shape index: {}]
  %s5 = sld [smem:[#allocation0]]
  $region131: #{_lambda_.12} parent=0
    _
  %s7 = ssub.s32 1, %s5
  %s8 = scalar_select 0, %s7, %s5
  $region1: #{_lambda_.12} parent=0
    #allocation2 [shape = 'u8[8192]{0}', space=vmem, size = 0x2000, scoped, tag = 'input window, operand 0']
    #allocation3 [shape = 'u8[8192]{0}', space=vmem, size = 0x2000, scoped, tag = 'input window, operand 1']
    loop: start=0, step=1, limit=4
    $region2: #{_lambda_.12} parent=1 // loop_pre_header
      _
    $region3: #{_lambda_.12} parent=1 // loop_header
      %s10 = sphi 0, %s14
      %p11 = scmp.ge.s32.totalorder %s10, 4
      %s17 = sphi 0, %s29
      %s18 = sphi 0, %s25
      %s19 = sphi 0, %s17
      %s20 = sphi 0, %s18
      %s21 = sphi 0, %s19
      %s22 = sphi 0, %s20
      %s34 = sphi 0, %s36
      %s37 = sphi 0, %s34
      %s38 = sphi 0, %s37
      %s54 = sphi 0, %s38
      %s64 = sphi 0, %s66
      %s67 = sphi 0, %s64
      %s68 = sphi 0, %s67
      %s84 = sphi 0, %s68
      %s88 = sphi 0, %s88
      %s90 = sphi 0, %s88
      %s91 = sphi 0, %s90
      %s105 = sphi 0, %s91
      %s109 = sphi 0, %s109
      %s111 = sphi 0, %s109
      %s112 = sphi 0, %s111
      %s126 = sphi 0, %s112
      %s134 = sphi 0, %s136
      %s137 = sphi 0, %s134
      %s138 = sphi 0, %s137
      %s154 = sphi 0, %s138
    $region4: #{_lambda_.12} parent=1 // loop_header_branch
      %13 = sbr.rel (%p11) target = $region8
    $region5: #{_lambda_.12} parent=1 // loop_body
      %s15 = ssub.s32 %s10, 1
      %s16 = ssub.s32 %s10, 2
      %s23 = sadd.s32 1, %s18
      %p24 = scmp.ge.s32.totalorder %s23, 1
      %s25 = scalar_select %p24, 0, %s23
      %s26 = sadd.s32 1, %s17
      %s27 = scalar_select %p24, %s26, %s17
      %p28 = scmp.ge.s32.totalorder %s27, 2
      %s29 = scalar_select %p28, 0, %s27
      %s30 = ssub.s32 %s17, %s29
      %s31 = ssub.s32 %s18, %s25
      %s32 = sor.u32 %s30, %s31
      %p33 = scmp.eq.s32.totalorder %s32, 0
      %s35 = sadd.s32 %s34, 1
      %s36 = scalar_select %p33, %s34, %s35
      %p39 = pneg %p33
      %p40 = scmp.eq.s32.totalorder %s10, 1
      %p41 = por %p39, %p40
      %p42 = scmp.ne.s32.totalorder %s34, %s37
      %p43 = scmp.eq.s32.totalorder %s10, 0
      %p44 = por %p42, %p43
      %p45 = scmp.ne.s32.totalorder %s34, %s37
      %p46 = scmp.eq.s32.totalorder %s15, 1
      %p47 = por %p45, %p46
      %p48 = scmp.ne.s32.totalorder %s37, %s38
      %p49 = scmp.eq.s32.totalorder %s15, 0
      %p50 = por %p48, %p49
      %p51 = scmp.ne.s32.totalorder %s37, %s38
      %p52 = scmp.eq.s32.totalorder %s16, 1
      %p53 = por %p51, %p52
      %p55 = scmp.ne.s32.totalorder %s38, %s54
      %p56 = scmp.eq.s32.totalorder %s16, 0
      %p57 = por %p55, %p56
      %s58 = sadd.s32 %s18, 1
      %s59 = sadd.s32 %s25, 1
      %s60 = ssub.s32 %s17, %s29
      %s61 = ssub.s32 %s58, %s59
      %s62 = sor.u32 %s60, %s61
      %p63 = scmp.eq.s32.totalorder %s62, 0
      %s65 = sadd.s32 %s64, 1
      %s66 = scalar_select %p63, %s64, %s65
      %p69 = pneg %p63
      %p70 = scmp.eq.s32.totalorder %s10, 1
      %p71 = por %p69, %p70
      %p72 = scmp.ne.s32.totalorder %s64, %s67
      %p73 = scmp.eq.s32.totalorder %s10, 0
      %p74 = por %p72, %p73
      %p75 = scmp.ne.s32.totalorder %s64, %s67
      %p76 = scmp.eq.s32.totalorder %s15, 1
      %p77 = por %p75, %p76
      %p78 = scmp.ne.s32.totalorder %s67, %s68
      %p79 = scmp.eq.s32.totalorder %s15, 0
      %p80 = por %p78, %p79
      %p81 = scmp.ne.s32.totalorder %s67, %s68
      %p82 = scmp.eq.s32.totalorder %s16, 1
      %p83 = por %p81, %p82
      %p85 = scmp.ne.s32.totalorder %s68, %s84
      %p86 = scmp.eq.s32.totalorder %s16, 0
      %p87 = por %p85, %p86
      %s89 = sadd.s32 %s88, 1
      %p92 = scmp.eq.s32.totalorder %s10, 1
      %p93 = scmp.ne.s32.totalorder %s88, %s90
      %p94 = scmp.eq.s32.totalorder %s10, 0
      %p95 = por %p93, %p94
      %p96 = scmp.ne.s32.totalorder %s88, %s90
      %p97 = scmp.eq.s32.totalorder %s15, 1
      %p98 = por %p96, %p97
      %p99 = scmp.ne.s32.totalorder %s90, %s91
      %p100 = scmp.eq.s32.totalorder %s15, 0
      %p101 = por %p99, %p100
      %p102 = scmp.ne.s32.totalorder %s90, %s91
      %p103 = scmp.eq.s32.totalorder %s16, 1
      %p104 = por %p102, %p103
      %p106 = scmp.ne.s32.totalorder %s91, %s105
      %p107 = scmp.eq.s32.totalorder %s16, 0
      %p108 = por %p106, %p107
      %s110 = sadd.s32 %s109, 1
      %p113 = scmp.eq.s32.totalorder %s10, 1
      %p114 = scmp.ne.s32.totalorder %s109, %s111
      %p115 = scmp.eq.s32.totalorder %s10, 0
      %p116 = por %p114, %p115
      %p117 = scmp.ne.s32.totalorder %s109, %s111
      %p118 = scmp.eq.s32.totalorder %s15, 1
      %p119 = por %p117, %p118
      %p120 = scmp.ne.s32.totalorder %s111, %s112
      %p121 = scmp.eq.s32.totalorder %s15, 0
      %p122 = por %p120, %p121
      %p123 = scmp.ne.s32.totalorder %s111, %s112
      %p124 = scmp.eq.s32.totalorder %s16, 1
      %p125 = por %p123, %p124
      %p127 = scmp.ne.s32.totalorder %s112, %s126
      %p128 = scmp.eq.s32.totalorder %s16, 0
      %p129 = por %p127, %p128
      %s130 = ssub.s32 %s17, %s29
      %s131 = ssub.s32 %s18, %s25
      %s132 = sor.u32 %s130, %s131
      %p133 = scmp.eq.s32.totalorder %s132, 0
      %s135 = sadd.s32 %s134, 1
      %s136 = scalar_select %p133, %s134, %s135
      %p139 = pneg %p133
      %p140 = scmp.eq.s32.totalorder %s10, 1
      %p141 = por %p139, %p140
      %p142 = scmp.ne.s32.totalorder %s134, %s137
      %p143 = scmp.eq.s32.totalorder %s10, 0
      %p144 = por %p142, %p143
      %p145 = scmp.ne.s32.totalorder %s134, %s137
      %p146 = scmp.eq.s32.totalorder %s15, 1
      %p147 = por %p145, %p146
      %p148 = scmp.ne.s32.totalorder %s137, %s138
      %p149 = scmp.eq.s32.totalorder %s15, 0
      %p150 = por %p148, %p149
      %p151 = scmp.ne.s32.totalorder %s137, %s138
      %p152 = scmp.eq.s32.totalorder %s16, 1
      %p153 = por %p151, %p152
      %p155 = scmp.ne.s32.totalorder %s138, %s154
      %p156 = scmp.eq.s32.totalorder %s16, 0
      %p157 = por %p155, %p156
      %p158 = scmp.le.s32.totalorder 1, %s10
      %p159 = scmp.lt.s32.totalorder %s10, 3
      %p160 = pnand %p158, %p159
      %p161 = pneg %p160
      // Predicated region
      $region9: #{_lambda_.12} parent=5 // pred_check
        _
      $region10: #{_lambda_.12} parent=5 // pred_check_branch
        %163 = sbr.rel (%p160) target = $region12
      $region11: #{_lambda_.12} parent=5 // pred_region
        %s164 = ssub.s32 %s10, 1
        // Predicated region
        $region13: #{_lambda_.12} parent=11 // pred_check
          %p165 = pneg %p101
        $region14: #{_lambda_.12} parent=11 // pred_check_branch
          %167 = sbr.rel (%p165) target = $region16
        $region15: #{_lambda_.12} parent=11 // pred_region
          _
        $region16: #{_lambda_.12} parent=11 // pred_fallthru
          _
        // Predicated region
        $region17: #{_lambda_.12} parent=11 // pred_check
          %p168 = pneg %p122
        $region18: #{_lambda_.12} parent=11 // pred_check_branch
          %170 = sbr.rel (%p168) target = $region20
        $region19: #{_lambda_.12} parent=11 // pred_region
          _
        $region20: #{_lambda_.12} parent=11 // pred_fallthru
          _
      $region12: #{_lambda_.12} parent=5 // pred_fallthru
        _
      %p171 = scmp.lt.s32.totalorder %s10, 2
      // Predicated region
      $region21: #{_lambda_.12} parent=5 // pred_check
        %p172 = pneg %p171
      $region22: #{_lambda_.12} parent=5 // pred_check_branch
        %174 = sbr.rel (%p172) target = $region24
      $region23: #{_lambda_.12} parent=5 // pred_region
        // Predicated region
        $region25: #{_lambda_.12} parent=23 // pred_check
          %p175 = pneg %p44
        $region26: #{_lambda_.12} parent=23 // pred_check_branch
          %177 = sbr.rel (%p175) target = $region28
        $region27: #{_lambda_.12} parent=23 // pred_region
          %s178 = sand.u32 %s34, 1
          %s179 = sand.u32 %s34, 1
          %s180 = smul.addr %s179, 8
          %s181 = scalar_lea.vmem [#allocation2], %s180
          %s182 = smul.addr %s17, 4
          %s183 = sadd.s32 %s18, %s182
          %s184 = smul.addr %s183, 4
          %s185 = scalar_lea.vmem %s0, %s184
          // Predicated region
          $region29: #{_lambda_.12} parent=27 // pred_check
            _
          $region30: #{_lambda_.12} parent=27 // pred_check_branch
            %187 = sbr.rel (0) target = $region32
          $region31: #{_lambda_.12} parent=27 // pred_region
            // Predicated region
            $region33: #{_lambda_.12} parent=31 // pred_check
              _
            $region34: #{_lambda_.12} parent=31 // pred_check_branch
              %189 = sbr.rel target = $region36
            $region35: #{_lambda_.12} parent=31 // pred_region
              // Predicated region
              $region48: #{_lambda_.12} parent=35 // pred_check
                _
              $region49: #{_lambda_.12} parent=35 // pred_check_branch
                %207 = sbr.rel (0) target = $region51
              $region50: #{_lambda_.12} parent=35 // pred_region
                loop: start=0, step=1, limit=1
                $region52: #{_lambda_.12} parent=50 // loop_pre_header
                  _
                $region53: #{_lambda_.12} parent=50 // loop_header
                  %s209 = sphi 0, %s213
                  %p210 = scmp.ge.s32.totalorder %s209, 1
                  %s214 = sphi %s185, %s185
                  %s215 = sphi %s181, %s181
                $region54: #{_lambda_.12} parent=50 // loop_header_branch
                  %212 = sbr.rel (%p210) target = $region58
                $region55: #{_lambda_.12} parent=50 // loop_body
                  _
                $region56: #{_lambda_.12} parent=50 // loop_footer
                  %s213 = sadd.s32 1, %s209
                $region57: #{_lambda_.12} parent=50 // loop_footer_branch
                  %208 = sbr.rel target = $region53
                $region58: #{_lambda_.12} parent=50 // loop_exit
                  _
                %s217 = ssub.s32 16, 1
                loop: start=0, step=1, limit=1
                $region59: #{_lambda_.12} parent=50 // loop_pre_header
                  _
                $region60: #{_lambda_.12} parent=50 // loop_header
                  %s219 = sphi 0, %s223
                  %p220 = scmp.ge.s32.totalorder %s219, 1
                  %s224 = sphi %s185, %s185
                  %s225 = sphi %s181, %s181
                $region61: #{_lambda_.12} parent=50 // loop_header_branch
                  %222 = sbr.rel (%p220) target = $region65
                $region62: #{_lambda_.12} parent=50 // loop_body
                  %v226 = vld [vmem:[%s224] sm:%s217]
                  %227 = vst [vmem:[%s225] sm:%s217] %v226
                  %v228 = vld [vmem:[%s224 + $0x8] sm:%s217]
                  %229 = vst [vmem:[%s225 + $0x4] sm:%s217] %v228
                $region63: #{_lambda_.12} parent=50 // loop_footer
                  %s223 = sadd.s32 1, %s219
                $region64: #{_lambda_.12} parent=50 // loop_footer_branch
                  %218 = sbr.rel target = $region60
                $region65: #{_lambda_.12} parent=50 // loop_exit
                  _
              $region51: #{_lambda_.12} parent=35 // pred_fallthru
                _
            $region36: #{_lambda_.12} parent=31 // pred_fallthru
              _
            // Predicated region
            $region37: #{_lambda_.12} parent=31 // pred_check
              _
            $region38: #{_lambda_.12} parent=31 // pred_check_branch
              %191 = sbr.rel (0) target = $region40
            $region39: #{_lambda_.12} parent=31 // pred_region
              %s193 = ssub.s32 16, 1
              loop: start=0, step=1, limit=1
              $region41: #{_lambda_.12} parent=39 // loop_pre_header
                _
              $region42: #{_lambda_.12} parent=39 // loop_header
                %s195 = sphi 0, %s199
                %p196 = scmp.ge.s32.totalorder %s195, 1
                %s200 = sphi %s185, %s185
                %s201 = sphi %s181, %s181
              $region43: #{_lambda_.12} parent=39 // loop_header_branch
                %198 = sbr.rel (%p196) target = $region47
              $region44: #{_lambda_.12} parent=39 // loop_body
                %v202 = vld [vmem:[%s200] sm:%s193]
                %203 = vst [vmem:[%s201] sm:%s193] %v202
                %v204 = vld [vmem:[%s200 + $0x8] sm:%s193]
                %205 = vst [vmem:[%s201 + $0x4] sm:%s193] %v204
              $region45: #{_lambda_.12} parent=39 // loop_footer
                %s199 = sadd.s32 1, %s195
              $region46: #{_lambda_.12} parent=39 // loop_footer_branch
                %194 = sbr.rel target = $region42
              $region47: #{_lambda_.12} parent=39 // loop_exit
                _
            $region40: #{_lambda_.12} parent=31 // pred_fallthru
              _
          $region32: #{_lambda_.12} parent=27 // pred_fallthru
            _
          %230 = vnop
        $region28: #{_lambda_.12} parent=23 // pred_fallthru
          _
        // Predicated region
        $region66: #{_lambda_.12} parent=23 // pred_check
          %p231 = pneg %p74
        $region67: #{_lambda_.12} parent=23 // pred_check_branch
          %233 = sbr.rel (%p231) target = $region69
        $region68: #{_lambda_.12} parent=23 // pred_region
          %s234 = sand.u32 %s64, 1
          %s235 = sand.u32 %s64, 1
          %s236 = smul.addr %s235, 8
          %s237 = scalar_lea.vmem [#allocation3], %s236
          %s238 = sadd.s32 %s18, 1
          %s239 = smul.addr %s17, 4
          %s240 = sadd.s32 %s238, %s239
          %s241 = smul.addr %s240, 4
          %s242 = scalar_lea.vmem %s1, %s241
          // Predicated region
          $region70: #{_lambda_.12} parent=68 // pred_check
            _
          $region71: #{_lambda_.12} parent=68 // pred_check_branch
            %244 = sbr.rel (0) target = $region73
          $region72: #{_lambda_.12} parent=68 // pred_region
            // Predicated region
            $region74: #{_lambda_.12} parent=72 // pred_check
              _
            $region75: #{_lambda_.12} parent=72 // pred_check_branch
              %246 = sbr.rel target = $region77
            $region76: #{_lambda_.12} parent=72 // pred_region
              // Predicated region
              $region89: #{_lambda_.12} parent=76 // pred_check
                _
              $region90: #{_lambda_.12} parent=76 // pred_check_branch
                %264 = sbr.rel (0) target = $region92
              $region91: #{_lambda_.12} parent=76 // pred_region
                loop: start=0, step=1, limit=1
                $region93: #{_lambda_.12} parent=91 // loop_pre_header
                  _
                $region94: #{_lambda_.12} parent=91 // loop_header
                  %s266 = sphi 0, %s270
                  %p267 = scmp.ge.s32.totalorder %s266, 1
                  %s271 = sphi %s242, %s242
                  %s272 = sphi %s237, %s237
                $region95: #{_lambda_.12} parent=91 // loop_header_branch
                  %269 = sbr.rel (%p267) target = $region99
                $region96: #{_lambda_.12} parent=91 // loop_body
                  _
                $region97: #{_lambda_.12} parent=91 // loop_footer
                  %s270 = sadd.s32 1, %s266
                $region98: #{_lambda_.12} parent=91 // loop_footer_branch
                  %265 = sbr.rel target = $region94
                $region99: #{_lambda_.12} parent=91 // loop_exit
                  _
                %s274 = ssub.s32 16, 1
                loop: start=0, step=1, limit=1
                $region100: #{_lambda_.12} parent=91 // loop_pre_header
                  _
                $region101: #{_lambda_.12} parent=91 // loop_header
                  %s276 = sphi 0, %s280
                  %p277 = scmp.ge.s32.totalorder %s276, 1
                  %s281 = sphi %s242, %s242
                  %s282 = sphi %s237, %s237
                $region102: #{_lambda_.12} parent=91 // loop_header_branch
                  %279 = sbr.rel (%p277) target = $region106
                $region103: #{_lambda_.12} parent=91 // loop_body
                  %v283 = vld [vmem:[%s281] sm:%s274]
                  %284 = vst [vmem:[%s282] sm:%s274] %v283
                  %v285 = vld [vmem:[%s281 + $0x8] sm:%s274]
                  %286 = vst [vmem:[%s282 + $0x4] sm:%s274] %v285
                $region104: #{_lambda_.12} parent=91 // loop_footer
                  %s280 = sadd.s32 1, %s276
                $region105: #{_lambda_.12} parent=91 // loop_footer_branch
                  %275 = sbr.rel target = $region101
                $region106: #{_lambda_.12} parent=91 // loop_exit
                  _
              $region92: #{_lambda_.12} parent=76 // pred_fallthru
                _
            $region77: #{_lambda_.12} parent=72 // pred_fallthru
              _
            // Predicated region
            $region78: #{_lambda_.12} parent=72 // pred_check
              _
            $region79: #{_lambda_.12} parent=72 // pred_check_branch
              %248 = sbr.rel (0) target = $region81
            $region80: #{_lambda_.12} parent=72 // pred_region
              %s250 = ssub.s32 16, 1
              loop: start=0, step=1, limit=1
              $region82: #{_lambda_.12} parent=80 // loop_pre_header
                _
              $region83: #{_lambda_.12} parent=80 // loop_header
                %s252 = sphi 0, %s256
                %p253 = scmp.ge.s32.totalorder %s252, 1
                %s257 = sphi %s242, %s242
                %s258 = sphi %s237, %s237
              $region84: #{_lambda_.12} parent=80 // loop_header_branch
                %255 = sbr.rel (%p253) target = $region88
              $region85: #{_lambda_.12} parent=80 // loop_body
                %v259 = vld [vmem:[%s257] sm:%s250]
                %260 = vst [vmem:[%s258] sm:%s250] %v259
                %v261 = vld [vmem:[%s257 + $0x8] sm:%s250]
                %262 = vst [vmem:[%s258 + $0x4] sm:%s250] %v261
              $region86: #{_lambda_.12} parent=80 // loop_footer
                %s256 = sadd.s32 1, %s252
              $region87: #{_lambda_.12} parent=80 // loop_footer_branch
                %251 = sbr.rel target = $region83
              $region88: #{_lambda_.12} parent=80 // loop_exit
                _
            $region81: #{_lambda_.12} parent=72 // pred_fallthru
              _
          $region73: #{_lambda_.12} parent=68 // pred_fallthru
            _
          %287 = vnop
        $region69: #{_lambda_.12} parent=23 // pred_fallthru
          _
      $region24: #{_lambda_.12} parent=5 // pred_fallthru
        _
      %p288 = scmp.le.s32.totalorder 1, %s10
      %p289 = scmp.lt.s32.totalorder %s10, 3
      %p290 = pnand %p288, %p289
      %p291 = pneg %p290
      // Predicated region
      $region107: #{_lambda_.12} parent=5 // pred_check
        _
      $region108: #{_lambda_.12} parent=5 // pred_check_branch
        %293 = sbr.rel (%p290) target = $region110
      $region109: #{_lambda_.12} parent=5 // pred_region
        %s294 = ssub.s32 %s10, 1
        %s295 = sand.u32 %s37, 1
        %s296 = sand.u32 %s37, 1
        %s297 = smul.addr %s296, 8
        %s298 = scalar_lea.vmem [#allocation2], %s297
        // Predicated region
        $region111: #{_lambda_.12} parent=109 // pred_check
          %p299 = pneg %p50
        $region112: #{_lambda_.12} parent=109 // pred_check_branch
          %301 = sbr.rel (%p299) target = $region114
        $region113: #{_lambda_.12} parent=109 // pred_region
          _
        $region114: #{_lambda_.12} parent=109 // pred_fallthru
          _
        %s302 = sand.u32 %s67, 1
        %s303 = sand.u32 %s67, 1
        %s304 = smul.addr %s303, 8
        %s305 = scalar_lea.vmem [#allocation3], %s304
        // Predicated region
        $region115: #{_lambda_.12} parent=109 // pred_check
          %p306 = pneg %p80
        $region116: #{_lambda_.12} parent=109 // pred_check_branch
          %308 = sbr.rel (%p306) target = $region118
        $region117: #{_lambda_.12} parent=109 // pred_region
          _
        $region118: #{_lambda_.12} parent=109 // pred_fallthru
          _
        %s309 = sand.u32 %s37, 1
        %s310 = sand.u32 %s37, 1
        %s311 = smul.addr %s310, 8
        %s312 = scalar_lea.vmem [#allocation2], %s311
        %p313 = pneg %p50
        %p314 = pneg %p47
        %s315 = sand.u32 %s67, 1
        %s316 = sand.u32 %s67, 1
        %s317 = smul.addr %s316, 8
        %s318 = scalar_lea.vmem [#allocation3], %s317
        %p319 = pneg %p80
        %p320 = pneg %p77
        %p321 = pneg %p101
        %p322 = pneg %p98
        %p323 = pneg %p122
        %p324 = pneg %p119
        %p325 = pneg %p150
        %p326 = pneg %p147
        %p327 = scmp.lt.s32.totalorder %s19, 1
        %s328 = scalar_select %p327, %s19, 1
        %p329 = scmp.lt.s32.totalorder %s20, 0
        %s330 = scalar_select %p329, %s20, 0
        %s331 = smul.addr %s328, 2
        %s332 = sadd.s32 %s330, %s331
        %s333 = smul.addr %s332, 4
        %s334 = scalar_lea.vmem %s4, %s333
        %s335 = sadd.s32 %s20, 1
        %p336 = scmp.lt.s32.totalorder %s19, 1
        %s337 = scalar_select %p336, %s19, 1
        %p338 = scmp.lt.s32.totalorder %s20, 0
        %s339 = scalar_select %p338, %s20, 0
        %s340 = smul.addr %s337, 2
        %s341 = sadd.s32 %s339, %s340
        %s342 = smul.addr %s341, 4
        %s343 = scalar_lea.vmem %s4, %s342
        %v345 = vld [vmem:[%s298] sm:$0xf]
        %v346 = vld [vmem:[%s298 + $0x4] sm:$0xf]
        %v347 = vld [vmem:[%s2] sm:$0xf]
        %v348 = vld [vmem:[%s2 + $0x4] sm:$0xf]
        %v349 = vld [vmem:[%s305] sm:$0xf]
        %v350 = vld [vmem:[%s305 + $0x4] sm:$0xf]
        %v353 = vunpack.c.l.b16 %v345
        %v354 = vunpack.c.l.b16 %v346
        %v355 = vpack.c.b16 %v354, %v353
        %v358 = vunpack.c.l.b16 %v349
        %v359 = vunpack.c.l.b16 %v350
        %v360 = vpack.c.b16 %v359, %v358
        %s361 = scalar_lea.vmem %s2, 8
        %v362 = vld [vmem:[%s361] sm:$0xf]
        %v363 = vld [vmem:[%s361 + $0x4] sm:$0xf]
        %v366 = vunpack.c.l.b16 %v362
        %v367 = vunpack.c.l.b16 %v363
        %v368 = vpack.c.b16 %v367, %v366
        %369 = vrot.lane.b32.xlu0 %v355, 127
        %v370 = vpop.permute.xlu0 %369
        %371 = vrot.lane.b32.xlu0 %v360, 127
        %v372 = vpop.permute.xlu0 %371
        %vm373 = vcmask 1039360
        %v374 = vsel %vm373, %v370, %v372
        %vm376 = vcmask 130048
        %v378 = vsel %vm376, %v368, 0
        %380 = vmatprep.subr.bf16.mxu0 0
        %381 = vmatpush1.bf16.msra.mxu0 0
        %382 = vmatprep.subr.bf16.mxu0 0
        %383 = vmatpush1.bf16.msra.mxu0 0
        %384 = vmatprep.subr.bf16.mxu0 0
        %385 = vmatpush1.bf16.msra.mxu0 0
        %386 = vmatprep.subr.bf16.mxu0 0
        %387 = vmatpush1.bf16.msra.mxu0 0
        %388 = vmatprep.subr.bf16.mxu0 0
        %389 = vmatpush1.bf16.msra.mxu0 0
        %390 = vmatprep.subr.bf16.mxu0 0
        %391 = vmatpush1.bf16.msra.mxu0 0
        %392 = vmatprep.subr.bf16.mxu0 0
        %393 = vmatpush1.bf16.msra.mxu0 0
        %394 = vmatprep.subr.bf16.mxu0 0
        %395 = vmatpush1.bf16.msra.mxu0 %v374
        %396 = vmatprep.subr.bf16.mxu0 0
        %397 = vmatpush2.bf16.msra.mxu0 0
        %398 = vmatprep.subr.bf16.mxu0 0
        %399 = vmatpush2.bf16.msra.mxu0 0
        %400 = vmatprep.subr.bf16.mxu0 0
        %401 = vmatpush2.bf16.msra.mxu0 0
        %402 = vmatprep.subr.bf16.mxu0 0
        %403 = vmatpush2.bf16.msra.mxu0 0
        %404 = vmatprep.subr.bf16.mxu0 0
        %405 = vmatpush2.bf16.msra.mxu0 0
        %406 = vmatprep.subr.bf16.mxu0 0
        %407 = vmatpush2.bf16.msra.mxu0 0
        %408 = vmatprep.subr.bf16.mxu0 0
        %409 = vmatpush2.bf16.msra.mxu0 0
        %410 = vmatprep.subr.bf16.mxu0 0
        %411 = vmatpush2.bf16.msra.mxu0 0
        %412 = vmatprep.mubr.bf16.mxu0 0
        %413 = vmatmul.mubr.bf16.gmra.mxu0 %v378
        %v414 = vpop.f32.mrf.mxu0
        %v415 = vadd.f32 0.0, %v414
        %v416 = vpop.f32.mrf.mxu0
        %v417 = vpop.f32.mrf.mxu0
        %v418 = vadd.f32 0.0, %v417
        %v419 = vpop.f32.mrf.mxu0
        %420 = vdwg.mxu0
        %v423 = vunpack.c.l.b16 %v347
        %v424 = vunpack.c.l.b16 %v348
        %v425 = vpack.c.b16 %v424, %v423
        %v428 = vsel %vm376, %v425, 0
        %430 = vmatprep.subr.bf16.mxu0 0
        %431 = vmatpush1.bf16.msra.mxu0 0
        %432 = vmatprep.subr.bf16.mxu0 0
        %433 = vmatpush1.bf16.msra.mxu0 0
        %434 = vmatprep.subr.bf16.mxu0 0
        %435 = vmatpush1.bf16.msra.mxu0 0
        %436 = vmatprep.subr.bf16.mxu0 0
        %437 = vmatpush1.bf16.msra.mxu0 0
        %438 = vmatprep.subr.bf16.mxu0 0
        %439 = vmatpush1.bf16.msra.mxu0 0
        %440 = vmatprep.subr.bf16.mxu0 0
        %441 = vmatpush1.bf16.msra.mxu0 0
        %442 = vmatprep.subr.bf16.mxu0 0
        %443 = vmatpush1.bf16.msra.mxu0 0
        %444 = vmatprep.subr.bf16.mxu0 0
        %445 = vmatpush1.bf16.msra.mxu0 %v355
        %446 = vmatprep.subr.bf16.mxu0 0
        %447 = vmatpush2.bf16.msra.mxu0 0
        %448 = vmatprep.subr.bf16.mxu0 0
        %449 = vmatpush2.bf16.msra.mxu0 0
        %450 = vmatprep.subr.bf16.mxu0 0
        %451 = vmatpush2.bf16.msra.mxu0 0
        %452 = vmatprep.subr.bf16.mxu0 0
        %453 = vmatpush2.bf16.msra.mxu0 0
        %454 = vmatprep.subr.bf16.mxu0 0
        %455 = vmatpush2.bf16.msra.mxu0 0
        %456 = vmatprep.subr.bf16.mxu0 0
        %457 = vmatpush2.bf16.msra.mxu0 0
        %458 = vmatprep.subr.bf16.mxu0 0
        %459 = vmatpush2.bf16.msra.mxu0 0
        %460 = vmatprep.subr.bf16.mxu0 0
        %461 = vmatpush2.bf16.msra.mxu0 0
        %462 = vmatprep.mubr.bf16.mxu0 0
        %463 = vmatmul.mubr.bf16.gmra.mxu0 %v428
        %v464 = vpop.f32.mrf.mxu0
        %v465 = vadd.f32 %v415, %v464
        %v466 = vpop.f32.mrf.mxu0
        %v467 = vpop.f32.mrf.mxu0
        %v468 = vadd.f32 %v418, %v467
        %v469 = vpop.f32.mrf.mxu0
        %470 = vdwg.mxu0
        %s471 = scalar_lea.vmem %s2, 16
        %v472 = vld [vmem:[%s471] sm:$0xf]
        %v473 = vld [vmem:[%s471 + $0x4] sm:$0xf]
        %v476 = vunpack.c.l.b16 %v472
        %v477 = vunpack.c.l.b16 %v473
        %v478 = vpack.c.b16 %v477, %v476
        %479 = vrot.lane.b32.xlu0 %v355, 126
        %v480 = vpop.permute.xlu0 %479
        %481 = vrot.lane.b32.xlu0 %v360, 126
        %v482 = vpop.permute.xlu0 %481
        %vm483 = vcmask 1031168
        %v484 = vsel %vm483, %v480, %v482
        %v487 = vsel %vm376, %v478, 0
        %489 = vmatprep.subr.bf16.mxu0 0
        %490 = vmatpush1.bf16.msra.mxu0 0
        %491 = vmatprep.subr.bf16.mxu0 0
        %492 = vmatpush1.bf16.msra.mxu0 0
        %493 = vmatprep.subr.bf16.mxu0 0
        %494 = vmatpush1.bf16.msra.mxu0 0
        %495 = vmatprep.subr.bf16.mxu0 0
        %496 = vmatpush1.bf16.msra.mxu0 0
        %497 = vmatprep.subr.bf16.mxu0 0
        %498 = vmatpush1.bf16.msra.mxu0 0
        %499 = vmatprep.subr.bf16.mxu0 0
        %500 = vmatpush1.bf16.msra.mxu0 0
        %501 = vmatprep.subr.bf16.mxu0 0
        %502 = vmatpush1.bf16.msra.mxu0 0
        %503 = vmatprep.subr.bf16.mxu0 0
        %504 = vmatpush1.bf16.msra.mxu0 %v484
        %505 = vmatprep.subr.bf16.mxu0 0
        %506 = vmatpush2.bf16.msra.mxu0 0
        %507 = vmatprep.subr.bf16.mxu0 0
        %508 = vmatpush2.bf16.msra.mxu0 0
        %509 = vmatprep.subr.bf16.mxu0 0
        %510 = vmatpush2.bf16.msra.mxu0 0
        %511 = vmatprep.subr.bf16.mxu0 0
        %512 = vmatpush2.bf16.msra.mxu0 0
        %513 = vmatprep.subr.bf16.mxu0 0
        %514 = vmatpush2.bf16.msra.mxu0 0
        %515 = vmatprep.subr.bf16.mxu0 0
        %516 = vmatpush2.bf16.msra.mxu0 0
        %517 = vmatprep.subr.bf16.mxu0 0
        %518 = vmatpush2.bf16.msra.mxu0 0
        %519 = vmatprep.subr.bf16.mxu0 0
        %520 = vmatpush2.bf16.msra.mxu0 0
        %521 = vmatprep.mubr.bf16.mxu0 0
        %522 = vmatmul.mubr.bf16.gmra.mxu0 %v487
        %v523 = vpop.f32.mrf.mxu0
        %v524 = vadd.f32 0.0, %v523
        %v525 = vpop.f32.mrf.mxu0
        %v526 = vpop.f32.mrf.mxu0
        %v527 = vadd.f32 0.0, %v526
        %v528 = vpop.f32.mrf.mxu0
        %529 = vdwg.mxu0
        %v530 = vadd.f32 %v465, %v524
        %v531 = vadd.f32 %v468, %v527
        %v532 = vld [vmem:[%s3] sm:$0xff]
        %v533 = vld [vmem:[%s3 + $0x8] sm:$0xff]
        %535 = vset.pattern.permute.xlu0 0
        %536 = vperm.xlu0 %535, %v532
        %v537 = vpop.permute.xlu0 %536
        %540 = vset.pattern.permute.xlu0 0
        %541 = vperm.xlu0 %540, %v533
        %v542 = vpop.permute.xlu0 %541
        %v544 = vadd.f32 %v530, %v537
        %v545 = vadd.f32 %v531, %v542
        %v546 = vmax.f32 %v544, 0.0
        %v547 = vmax.f32 %v545, 0.0
        %v548 = vpack.c.bf16 %v547, %v546
        %v550 = vunpack.c.l.b16 %v548
        %v551 = vunpack.c.h.b16 %v548
        %v552 = vpack.c.b16 %v550, %v550
        %v553 = vpack.c.b16 %v551, %v551
        %556 = vst [vmem:[%s343] sm:$0xf] %v552
        %557 = vst [vmem:[%s343 + $0x4] sm:$0xf] %v553
        %p558 = scmp.lt.s32.totalorder %s19, 1
        %s559 = scalar_select %p558, %s19, 1
        %p560 = scmp.lt.s32.totalorder %s20, 0
        %s561 = scalar_select %p560, %s20, 0
        %s562 = smul.addr %s559, 2
        %s563 = sadd.s32 %s561, %s562
        %s564 = smul.addr %s563, 4
        %s565 = scalar_lea.vmem %s4, %s564
        // Predicated region
        $region119: #{_lambda_.12} parent=109 // pred_check
          %p566 = pneg %p147
        $region120: #{_lambda_.12} parent=109 // pred_check_branch
          %568 = sbr.rel (%p566) target = $region122
        $region121: #{_lambda_.12} parent=109 // pred_region
          _
        $region122: #{_lambda_.12} parent=109 // pred_fallthru
          _
      $region110: #{_lambda_.12} parent=5 // pred_fallthru
        _
      %p569 = scmp.le.s32.totalorder 2, %s10
      // Predicated region
      $region123: #{_lambda_.12} parent=5 // pred_check
        %p570 = pneg %p569
      $region124: #{_lambda_.12} parent=5 // pred_check_branch
        %572 = sbr.rel (%p570) target = $region126
      $region125: #{_lambda_.12} parent=5 // pred_region
        %s573 = ssub.s32 %s10, 2
        // Predicated region
        $region127: #{_lambda_.12} parent=125 // pred_check
          %p574 = pneg %p153
        $region128: #{_lambda_.12} parent=125 // pred_check_branch
          %576 = sbr.rel (%p574) target = $region130
        $region129: #{_lambda_.12} parent=125 // pred_region
          %p577 = scmp.lt.s32.totalorder %s21, 1
          %s578 = scalar_select %p577, %s21, 1
          %p579 = scmp.lt.s32.totalorder %s22, 0
          %s580 = scalar_select %p579, %s22, 0
          %s581 = smul.addr %s578, 2
          %s582 = sadd.s32 %s580, %s581
          %s583 = smul.addr %s582, 4
          %s584 = scalar_lea.vmem %s4, %s583
        $region130: #{_lambda_.12} parent=125 // pred_fallthru
          _
      $region126: #{_lambda_.12} parent=5 // pred_fallthru
        _
    $region6: #{_lambda_.12} parent=1 // loop_footer
      %s14 = sadd.s32 1, %s10
    $region7: #{_lambda_.12} parent=1 // loop_footer_branch
      %9 = sbr.rel target = $region3
    $region8: #{_lambda_.12} parent=1 // loop_exit
      _

// kernel: _lambda_.14
$region0: #{_lambda_.14}
  #allocation0 [shape = 'u32[]', space=smem, size = 0x4, offset = 0x4, fixed_abs, tag = 'smem constant byte address 0x4 - core index']
  #allocation1 [shape = 'u32[144,128]{1,0:T(1,128)}', space=vmem, size = 0x12000, scoped, tag = 'internal scratch']
  %s0 = inlined_call_operand.vmem [shape: bf16[2,16,256], index: 0, kind: input, shape index: {}, may-alias: {0,1}]
  %s1 = inlined_call_operand.vmem [shape: bf16[2,16,256], index: 1, kind: input, shape index: {}, may-alias: {0,1}]
  %s2 = inlined_call_operand.vmem [shape: bf16[3,16,16], index: 2, kind: input, shape index: {}]
  %s3 = inlined_call_operand.vmem [shape: f32[16,1], index: 3, kind: input, shape index: {}]
  %s4 = inlined_call_operand.vmem [shape: bf16[2,16,128], index: 4, kind: input, shape index: {}]
  %s5 = inlined_call_operand.vmem [shape: bf16[2,16,128], index: 5, kind: output, shape index: {}]
  %s6 = sld [smem:[#allocation0]]
  $region135: #{_lambda_.14} parent=0
    _
  %s8 = ssub.s32 1, %s6
  %s9 = scalar_select 0, %s8, %s6
  $region1: #{_lambda_.14} parent=0
    #allocation2 [shape = 'u8[8192]{0}', space=vmem, size = 0x2000, scoped, tag = 'input window, operand 0']
    #allocation3 [shape = 'u8[8192]{0}', space=vmem, size = 0x2000, scoped, tag = 'input window, operand 1']
    loop: start=0, step=1, limit=4
    $region2: #{_lambda_.14} parent=1 // loop_pre_header
      _
    $region3: #{_lambda_.14} parent=1 // loop_header
      %s11 = sphi 0, %s15
      %p12 = scmp.ge.s32.totalorder %s11, 4
      %s18 = sphi 0, %s30
      %s19 = sphi 0, %s26
      %s20 = sphi 0, %s18
      %s21 = sphi 0, %s19
      %s22 = sphi 0, %s20
      %s23 = sphi 0, %s21
      %s35 = sphi 0, %s37
      %s38 = sphi 0, %s35
      %s39 = sphi 0, %s38
      %s55 = sphi 0, %s39
      %s65 = sphi 0, %s67
      %s68 = sphi 0, %s65
      %s69 = sphi 0, %s68
      %s85 = sphi 0, %s69
      %s89 = sphi 0, %s89
      %s91 = sphi 0, %s89
      %s92 = sphi 0, %s91
      %s106 = sphi 0, %s92
      %s110 = sphi 0, %s110
      %s112 = sphi 0, %s110
      %s113 = sphi 0, %s112
      %s127 = sphi 0, %s113
      %s135 = sphi 0, %s137
      %s138 = sphi 0, %s135
      %s139 = sphi 0, %s138
      %s155 = sphi 0, %s139
      %s163 = sphi 0, %s165
      %s166 = sphi 0, %s163
      %s167 = sphi 0, %s166
      %s183 = sphi 0, %s167
    $region4: #{_lambda_.14} parent=1 // loop_header_branch
      %14 = sbr.rel (%p12) target = $region8
    $region5: #{_lambda_.14} parent=1 // loop_body
      %s16 = ssub.s32 %s11, 1
      %s17 = ssub.s32 %s11, 2
      %s24 = sadd.s32 1, %s19
      %p25 = scmp.ge.s32.totalorder %s24, 1
      %s26 = scalar_select %p25, 0, %s24
      %s27 = sadd.s32 1, %s18
      %s28 = scalar_select %p25, %s27, %s18
      %p29 = scmp.ge.s32.totalorder %s28, 2
      %s30 = scalar_select %p29, 0, %s28
      %s31 = ssub.s32 %s18, %s30
      %s32 = ssub.s32 %s19, %s26
      %s33 = sor.u32 %s31, %s32
      %p34 = scmp.eq.s32.totalorder %s33, 0
      %s36 = sadd.s32 %s35, 1
      %s37 = scalar_select %p34, %s35, %s36
      %p40 = pneg %p34
      %p41 = scmp.eq.s32.totalorder %s11, 1
      %p42 = por %p40, %p41
      %p43 = scmp.ne.s32.totalorder %s35, %s38
      %p44 = scmp.eq.s32.totalorder %s11, 0
      %p45 = por %p43, %p44
      %p46 = scmp.ne.s32.totalorder %s35, %s38
      %p47 = scmp.eq.s32.totalorder %s16, 1
      %p48 = por %p46, %p47
      %p49 = scmp.ne.s32.totalorder %s38, %s39
      %p50 = scmp.eq.s32.totalorder %s16, 0
      %p51 = por %p49, %p50
      %p52 = scmp.ne.s32.totalorder %s38, %s39
      %p53 = scmp.eq.s32.totalorder %s17, 1
      %p54 = por %p52, %p53
      %p56 = scmp.ne.s32.totalorder %s39, %s55
      %p57 = scmp.eq.s32.totalorder %s17, 0
      %p58 = por %p56, %p57
      %s59 = sadd.s32 %s19, 1
      %s60 = sadd.s32 %s26, 1
      %s61 = ssub.s32 %s18, %s30
      %s62 = ssub.s32 %s59, %s60
      %s63 = sor.u32 %s61, %s62
      %p64 = scmp.eq.s32.totalorder %s63, 0
      %s66 = sadd.s32 %s65, 1
      %s67 = scalar_select %p64, %s65, %s66
      %p70 = pneg %p64
      %p71 = scmp.eq.s32.totalorder %s11, 1
      %p72 = por %p70, %p71
      %p73 = scmp.ne.s32.totalorder %s65, %s68
      %p74 = scmp.eq.s32.totalorder %s11, 0
      %p75 = por %p73, %p74
      %p76 = scmp.ne.s32.totalorder %s65, %s68
      %p77 = scmp.eq.s32.totalorder %s16, 1
      %p78 = por %p76, %p77
      %p79 = scmp.ne.s32.totalorder %s68, %s69
      %p80 = scmp.eq.s32.totalorder %s16, 0
      %p81 = por %p79, %p80
      %p82 = scmp.ne.s32.totalorder %s68, %s69
      %p83 = scmp.eq.s32.totalorder %s17, 1
      %p84 = por %p82, %p83
      %p86 = scmp.ne.s32.totalorder %s69, %s85
      %p87 = scmp.eq.s32.totalorder %s17, 0
      %p88 = por %p86, %p87
      %s90 = sadd.s32 %s89, 1
      %p93 = scmp.eq.s32.totalorder %s11, 1
      %p94 = scmp.ne.s32.totalorder %s89, %s91
      %p95 = scmp.eq.s32.totalorder %s11, 0
      %p96 = por %p94, %p95
      %p97 = scmp.ne.s32.totalorder %s89, %s91
      %p98 = scmp.eq.s32.totalorder %s16, 1
      %p99 = por %p97, %p98
      %p100 = scmp.ne.s32.totalorder %s91, %s92
      %p101 = scmp.eq.s32.totalorder %s16, 0
      %p102 = por %p100, %p101
      %p103 = scmp.ne.s32.totalorder %s91, %s92
      %p104 = scmp.eq.s32.totalorder %s17, 1
      %p105 = por %p103, %p104
      %p107 = scmp.ne.s32.totalorder %s92, %s106
      %p108 = scmp.eq.s32.totalorder %s17, 0
      %p109 = por %p107, %p108
      %s111 = sadd.s32 %s110, 1
      %p114 = scmp.eq.s32.totalorder %s11, 1
      %p115 = scmp.ne.s32.totalorder %s110, %s112
      %p116 = scmp.eq.s32.totalorder %s11, 0
      %p117 = por %p115, %p116
      %p118 = scmp.ne.s32.totalorder %s110, %s112
      %p119 = scmp.eq.s32.totalorder %s16, 1
      %p120 = por %p118, %p119
      %p121 = scmp.ne.s32.totalorder %s112, %s113
      %p122 = scmp.eq.s32.totalorder %s16, 0
      %p123 = por %p121, %p122
      %p124 = scmp.ne.s32.totalorder %s112, %s113
      %p125 = scmp.eq.s32.totalorder %s17, 1
      %p126 = por %p124, %p125
      %p128 = scmp.ne.s32.totalorder %s113, %s127
      %p129 = scmp.eq.s32.totalorder %s17, 0
      %p130 = por %p128, %p129
      %s131 = ssub.s32 %s18, %s30
      %s132 = ssub.s32 %s19, %s26
      %s133 = sor.u32 %s131, %s132
      %p134 = scmp.eq.s32.totalorder %s133, 0
      %s136 = sadd.s32 %s135, 1
      %s137 = scalar_select %p134, %s135, %s136
      %p140 = pneg %p134
      %p141 = scmp.eq.s32.totalorder %s11, 1
      %p142 = por %p140, %p141
      %p143 = scmp.ne.s32.totalorder %s135, %s138
      %p144 = scmp.eq.s32.totalorder %s11, 0
      %p145 = por %p143, %p144
      %p146 = scmp.ne.s32.totalorder %s135, %s138
      %p147 = scmp.eq.s32.totalorder %s16, 1
      %p148 = por %p146, %p147
      %p149 = scmp.ne.s32.totalorder %s138, %s139
      %p150 = scmp.eq.s32.totalorder %s16, 0
      %p151 = por %p149, %p150
      %p152 = scmp.ne.s32.totalorder %s138, %s139
      %p153 = scmp.eq.s32.totalorder %s17, 1
      %p154 = por %p152, %p153
      %p156 = scmp.ne.s32.totalorder %s139, %s155
      %p157 = scmp.eq.s32.totalorder %s17, 0
      %p158 = por %p156, %p157
      %s159 = ssub.s32 %s18, %s30
      %s160 = ssub.s32 %s19, %s26
      %s161 = sor.u32 %s159, %s160
      %p162 = scmp.eq.s32.totalorder %s161, 0
      %s164 = sadd.s32 %s163, 1
      %s165 = scalar_select %p162, %s163, %s164
      %p168 = pneg %p162
      %p169 = scmp.eq.s32.totalorder %s11, 1
      %p170 = por %p168, %p169
      %p171 = scmp.ne.s32.totalorder %s163, %s166
      %p172 = scmp.eq.s32.totalorder %s11, 0
      %p173 = por %p171, %p172
      %p174 = scmp.ne.s32.totalorder %s163, %s166
      %p175 = scmp.eq.s32.totalorder %s16, 1
      %p176 = por %p174, %p175
      %p177 = scmp.ne.s32.totalorder %s166, %s167
      %p178 = scmp.eq.s32.totalorder %s16, 0
      %p179 = por %p177, %p178
      %p180 = scmp.ne.s32.totalorder %s166, %s167
      %p181 = scmp.eq.s32.totalorder %s17, 1
      %p182 = por %p180, %p181
      %p184 = scmp.ne.s32.totalorder %s167, %s183
      %p185 = scmp.eq.s32.totalorder %s17, 0
      %p186 = por %p184, %p185
      %p187 = scmp.le.s32.totalorder 1, %s11
      %p188 = scmp.lt.s32.totalorder %s11, 3
      %p189 = pnand %p187, %p188
      %p190 = pneg %p189
      // Predicated region
      $region9: #{_lambda_.14} parent=5 // pred_check
        _
      $region10: #{_lambda_.14} parent=5 // pred_check_branch
        %192 = sbr.rel (%p189) target = $region12
      $region11: #{_lambda_.14} parent=5 // pred_region
        %s193 = ssub.s32 %s11, 1
        // Predicated region
        $region13: #{_lambda_.14} parent=11 // pred_check
          %p194 = pneg %p102
        $region14: #{_lambda_.14} parent=11 // pred_check_branch
          %196 = sbr.rel (%p194) target = $region16
        $region15: #{_lambda_.14} parent=11 // pred_region
          _
        $region16: #{_lambda_.14} parent=11 // pred_fallthru
          _
        // Predicated region
        $region17: #{_lambda_.14} parent=11 // pred_check
          %p197 = pneg %p123
        $region18: #{_lambda_.14} parent=11 // pred_check_branch
          %199 = sbr.rel (%p197) target = $region20
        $region19: #{_lambda_.14} parent=11 // pred_region
          _
        $region20: #{_lambda_.14} parent=11 // pred_fallthru
          _
      $region12: #{_lambda_.14} parent=5 // pred_fallthru
        _
      %p200 = scmp.lt.s32.totalorder %s11, 2
      // Predicated region
      $region21: #{_lambda_.14} parent=5 // pred_check
        %p201 = pneg %p200
      $region22: #{_lambda_.14} parent=5 // pred_check_branch
        %203 = sbr.rel (%p201) target = $region24
      $region23: #{_lambda_.14} parent=5 // pred_region
        // Predicated region
        $region25: #{_lambda_.14} parent=23 // pred_check
          %p204 = pneg %p45
        $region26: #{_lambda_.14} parent=23 // pred_check_branch
          %206 = sbr.rel (%p204) target = $region28
        $region27: #{_lambda_.14} parent=23 // pred_region
          %s207 = sand.u32 %s35, 1
          %s208 = sand.u32 %s35, 1
          %s209 = smul.addr %s208, 8
          %s210 = scalar_lea.vmem [#allocation2], %s209
          %s211 = smul.addr %s18, 4
          %s212 = sadd.s32 %s19, %s211
          %s213 = smul.addr %s212, 4
          %s214 = scalar_lea.vmem %s0, %s213
          // Predicated region
          $region29: #{_lambda_.14} parent=27 // pred_check
            _
          $region30: #{_lambda_.14} parent=27 // pred_check_branch
            %216 = sbr.rel (0) target = $region32
          $region31: #{_lambda_.14} parent=27 // pred_region
            // Predicated region
            $region33: #{_lambda_.14} parent=31 // pred_check
              _
            $region34: #{_lambda_.14} parent=31 // pred_check_branch
              %218 = sbr.rel target = $region36
            $region35: #{_lambda_.14} parent=31 // pred_region
              // Predicated region
              $region48: #{_lambda_.14} parent=35 // pred_check
                _
              $region49: #{_lambda_.14} parent=35 // pred_check_branch
                %236 = sbr.rel (0) target = $region51
              $region50: #{_lambda_.14} parent=35 // pred_region
                loop: start=0, step=1, limit=1
                $region52: #{_lambda_.14} parent=50 // loop_pre_header
                  _
                $region53: #{_lambda_.14} parent=50 // loop_header
                  %s238 = sphi 0, %s242
                  %p239 = scmp.ge.s32.totalorder %s238, 1
                  %s243 = sphi %s214, %s214
                  %s244 = sphi %s210, %s210
                $region54: #{_lambda_.14} parent=50 // loop_header_branch
                  %241 = sbr.rel (%p239) target = $region58
                $region55: #{_lambda_.14} parent=50 // loop_body
                  _
                $region56: #{_lambda_.14} parent=50 // loop_footer
                  %s242 = sadd.s32 1, %s238
                $region57: #{_lambda_.14} parent=50 // loop_footer_branch
                  %237 = sbr.rel target = $region53
                $region58: #{_lambda_.14} parent=50 // loop_exit
                  _
                %s246 = ssub.s32 16, 1
                loop: start=0, step=1, limit=1
                $region59: #{_lambda_.14} parent=50 // loop_pre_header
                  _
                $region60: #{_lambda_.14} parent=50 // loop_header
                  %s248 = sphi 0, %s252
                  %p249 = scmp.ge.s32.totalorder %s248, 1
                  %s253 = sphi %s214, %s214
                  %s254 = sphi %s210, %s210
                $region61: #{_lambda_.14} parent=50 // loop_header_branch
                  %251 = sbr.rel (%p249) target = $region65
                $region62: #{_lambda_.14} parent=50 // loop_body
                  %v255 = vld [vmem:[%s253] sm:%s246]
                  %256 = vst [vmem:[%s254] sm:%s246] %v255
                  %v257 = vld [vmem:[%s253 + $0x8] sm:%s246]
                  %258 = vst [vmem:[%s254 + $0x4] sm:%s246] %v257
                $region63: #{_lambda_.14} parent=50 // loop_footer
                  %s252 = sadd.s32 1, %s248
                $region64: #{_lambda_.14} parent=50 // loop_footer_branch
                  %247 = sbr.rel target = $region60
                $region65: #{_lambda_.14} parent=50 // loop_exit
                  _
              $region51: #{_lambda_.14} parent=35 // pred_fallthru
                _
            $region36: #{_lambda_.14} parent=31 // pred_fallthru
              _
            // Predicated region
            $region37: #{_lambda_.14} parent=31 // pred_check
              _
            $region38: #{_lambda_.14} parent=31 // pred_check_branch
              %220 = sbr.rel (0) target = $region40
            $region39: #{_lambda_.14} parent=31 // pred_region
              %s222 = ssub.s32 16, 1
              loop: start=0, step=1, limit=1
              $region41: #{_lambda_.14} parent=39 // loop_pre_header
                _
              $region42: #{_lambda_.14} parent=39 // loop_header
                %s224 = sphi 0, %s228
                %p225 = scmp.ge.s32.totalorder %s224, 1
                %s229 = sphi %s214, %s214
                %s230 = sphi %s210, %s210
              $region43: #{_lambda_.14} parent=39 // loop_header_branch
                %227 = sbr.rel (%p225) target = $region47
              $region44: #{_lambda_.14} parent=39 // loop_body
                %v231 = vld [vmem:[%s229] sm:%s222]
                %232 = vst [vmem:[%s230] sm:%s222] %v231
                %v233 = vld [vmem:[%s229 + $0x8] sm:%s222]
                %234 = vst [vmem:[%s230 + $0x4] sm:%s222] %v233
              $region45: #{_lambda_.14} parent=39 // loop_footer
                %s228 = sadd.s32 1, %s224
              $region46: #{_lambda_.14} parent=39 // loop_footer_branch
                %223 = sbr.rel target = $region42
              $region47: #{_lambda_.14} parent=39 // loop_exit
                _
            $region40: #{_lambda_.14} parent=31 // pred_fallthru
              _
          $region32: #{_lambda_.14} parent=27 // pred_fallthru
            _
          %259 = vnop
        $region28: #{_lambda_.14} parent=23 // pred_fallthru
          _
        // Predicated region
        $region66: #{_lambda_.14} parent=23 // pred_check
          %p260 = pneg %p75
        $region67: #{_lambda_.14} parent=23 // pred_check_branch
          %262 = sbr.rel (%p260) target = $region69
        $region68: #{_lambda_.14} parent=23 // pred_region
          %s263 = sand.u32 %s65, 1
          %s264 = sand.u32 %s65, 1
          %s265 = smul.addr %s264, 8
          %s266 = scalar_lea.vmem [#allocation3], %s265
          %s267 = sadd.s32 %s19, 1
          %s268 = smul.addr %s18, 4
          %s269 = sadd.s32 %s267, %s268
          %s270 = smul.addr %s269, 4
          %s271 = scalar_lea.vmem %s1, %s270
          // Predicated region
          $region70: #{_lambda_.14} parent=68 // pred_check
            _
          $region71: #{_lambda_.14} parent=68 // pred_check_branch
            %273 = sbr.rel (0) target = $region73
          $region72: #{_lambda_.14} parent=68 // pred_region
            // Predicated region
            $region74: #{_lambda_.14} parent=72 // pred_check
              _
            $region75: #{_lambda_.14} parent=72 // pred_check_branch
              %275 = sbr.rel target = $region77
            $region76: #{_lambda_.14} parent=72 // pred_region
              // Predicated region
              $region89: #{_lambda_.14} parent=76 // pred_check
                _
              $region90: #{_lambda_.14} parent=76 // pred_check_branch
                %293 = sbr.rel (0) target = $region92
              $region91: #{_lambda_.14} parent=76 // pred_region
                loop: start=0, step=1, limit=1
                $region93: #{_lambda_.14} parent=91 // loop_pre_header
                  _
                $region94: #{_lambda_.14} parent=91 // loop_header
                  %s295 = sphi 0, %s299
                  %p296 = scmp.ge.s32.totalorder %s295, 1
                  %s300 = sphi %s271, %s271
                  %s301 = sphi %s266, %s266
                $region95: #{_lambda_.14} parent=91 // loop_header_branch
                  %298 = sbr.rel (%p296) target = $region99
                $region96: #{_lambda_.14} parent=91 // loop_body
                  _
                $region97: #{_lambda_.14} parent=91 // loop_footer
                  %s299 = sadd.s32 1, %s295
                $region98: #{_lambda_.14} parent=91 // loop_footer_branch
                  %294 = sbr.rel target = $region94
                $region99: #{_lambda_.14} parent=91 // loop_exit
                  _
                %s303 = ssub.s32 16, 1
                loop: start=0, step=1, limit=1
                $region100: #{_lambda_.14} parent=91 // loop_pre_header
                  _
                $region101: #{_lambda_.14} parent=91 // loop_header
                  %s305 = sphi 0, %s309
                  %p306 = scmp.ge.s32.totalorder %s305, 1
                  %s310 = sphi %s271, %s271
                  %s311 = sphi %s266, %s266
                $region102: #{_lambda_.14} parent=91 // loop_header_branch
                  %308 = sbr.rel (%p306) target = $region106
                $region103: #{_lambda_.14} parent=91 // loop_body
                  %v312 = vld [vmem:[%s310] sm:%s303]
                  %313 = vst [vmem:[%s311] sm:%s303] %v312
                  %v314 = vld [vmem:[%s310 + $0x8] sm:%s303]
                  %315 = vst [vmem:[%s311 + $0x4] sm:%s303] %v314
                $region104: #{_lambda_.14} parent=91 // loop_footer
                  %s309 = sadd.s32 1, %s305
                $region105: #{_lambda_.14} parent=91 // loop_footer_branch
                  %304 = sbr.rel target = $region101
                $region106: #{_lambda_.14} parent=91 // loop_exit
                  _
              $region92: #{_lambda_.14} parent=76 // pred_fallthru
                _
            $region77: #{_lambda_.14} parent=72 // pred_fallthru
              _
            // Predicated region
            $region78: #{_lambda_.14} parent=72 // pred_check
              _
            $region79: #{_lambda_.14} parent=72 // pred_check_branch
              %277 = sbr.rel (0) target = $region81
            $region80: #{_lambda_.14} parent=72 // pred_region
              %s279 = ssub.s32 16, 1
              loop: start=0, step=1, limit=1
              $region82: #{_lambda_.14} parent=80 // loop_pre_header
                _
              $region83: #{_lambda_.14} parent=80 // loop_header
                %s281 = sphi 0, %s285
                %p282 = scmp.ge.s32.totalorder %s281, 1
                %s286 = sphi %s271, %s271
                %s287 = sphi %s266, %s266
              $region84: #{_lambda_.14} parent=80 // loop_header_branch
                %284 = sbr.rel (%p282) target = $region88
              $region85: #{_lambda_.14} parent=80 // loop_body
                %v288 = vld [vmem:[%s286] sm:%s279]
                %289 = vst [vmem:[%s287] sm:%s279] %v288
                %v290 = vld [vmem:[%s286 + $0x8] sm:%s279]
                %291 = vst [vmem:[%s287 + $0x4] sm:%s279] %v290
              $region86: #{_lambda_.14} parent=80 // loop_footer
                %s285 = sadd.s32 1, %s281
              $region87: #{_lambda_.14} parent=80 // loop_footer_branch
                %280 = sbr.rel target = $region83
              $region88: #{_lambda_.14} parent=80 // loop_exit
                _
            $region81: #{_lambda_.14} parent=72 // pred_fallthru
              _
          $region73: #{_lambda_.14} parent=68 // pred_fallthru
            _
          %316 = vnop
        $region69: #{_lambda_.14} parent=23 // pred_fallthru
          _
        // Predicated region
        $region107: #{_lambda_.14} parent=23 // pred_check
          %p317 = pneg %p145
        $region108: #{_lambda_.14} parent=23 // pred_check_branch
          %319 = sbr.rel (%p317) target = $region110
        $region109: #{_lambda_.14} parent=23 // pred_region
          %p320 = scmp.lt.s32.totalorder %s18, 1
          %s321 = scalar_select %p320, %s18, 1
          %p322 = scmp.lt.s32.totalorder %s19, 0
          %s323 = scalar_select %p322, %s19, 0
          %s324 = smul.addr %s321, 2
          %s325 = sadd.s32 %s323, %s324
          %s326 = smul.addr %s325, 4
          %s327 = scalar_lea.vmem %s4, %s326
        $region110: #{_lambda_.14} parent=23 // pred_fallthru
          _
      $region24: #{_lambda_.14} parent=5 // pred_fallthru
        _
      %p328 = scmp.le.s32.totalorder 1, %s11
      %p329 = scmp.lt.s32.totalorder %s11, 3
      %p330 = pnand %p328, %p329
      %p331 = pneg %p330
      // Predicated region
      $region111: #{_lambda_.14} parent=5 // pred_check
        _
      $region112: #{_lambda_.14} parent=5 // pred_check_branch
        %333 = sbr.rel (%p330) target = $region114
      $region113: #{_lambda_.14} parent=5 // pred_region
        %s334 = ssub.s32 %s11, 1
        %s335 = sand.u32 %s38, 1
        %s336 = sand.u32 %s38, 1
        %s337 = smul.addr %s336, 8
        %s338 = scalar_lea.vmem [#allocation2], %s337
        // Predicated region
        $region115: #{_lambda_.14} parent=113 // pred_check
          %p339 = pneg %p51
        $region116: #{_lambda_.14} parent=113 // pred_check_branch
          %341 = sbr.rel (%p339) target = $region118
        $region117: #{_lambda_.14} parent=113 // pred_region
          _
        $region118: #{_lambda_.14} parent=113 // pred_fallthru
          _
        %s342 = sand.u32 %s68, 1
        %s343 = sand.u32 %s68, 1
        %s344 = smul.addr %s343, 8
        %s345 = scalar_lea.vmem [#allocation3], %s344
        // Predicated region
        $region119: #{_lambda_.14} parent=113 // pred_check
          %p346 = pneg %p81
        $region120: #{_lambda_.14} parent=113 // pred_check_branch
          %348 = sbr.rel (%p346) target = $region122
        $region121: #{_lambda_.14} parent=113 // pred_region
          _
        $region122: #{_lambda_.14} parent=113 // pred_fallthru
          _
        %s349 = sand.u32 %s38, 1
        %s350 = sand.u32 %s38, 1
        %s351 = smul.addr %s350, 8
        %s352 = scalar_lea.vmem [#allocation2], %s351
        %p353 = pneg %p51
        %p354 = pneg %p48
        %s355 = sand.u32 %s68, 1
        %s356 = sand.u32 %s68, 1
        %s357 = smul.addr %s356, 8
        %s358 = scalar_lea.vmem [#allocation3], %s357
        %p359 = pneg %p81
        %p360 = pneg %p78
        %p361 = pneg %p102
        %p362 = pneg %p99
        %p363 = pneg %p123
        %p364 = pneg %p120
        %p365 = scmp.lt.s32.totalorder %s20, 1
        %s366 = scalar_select %p365, %s20, 1
        %p367 = scmp.lt.s32.totalorder %s21, 0
        %s368 = scalar_select %p367, %s21, 0
        %s369 = smul.addr %s366, 2
        %s370 = sadd.s32 %s368, %s369
        %s371 = smul.addr %s370, 4
        %s372 = scalar_lea.vmem %s4, %s371
        %p373 = pneg %p151
        %p374 = pneg %p148
        %p375 = pneg %p179
        %p376 = pneg %p176
        %p377 = scmp.lt.s32.totalorder %s20, 1
        %s378 = scalar_select %p377, %s20, 1
        %p379 = scmp.lt.s32.totalorder %s21, 0
        %s380 = scalar_select %p379, %s21, 0
        %s381 = smul.addr %s378, 2
        %s382 = sadd.s32 %s380, %s381
        %s383 = smul.addr %s382, 4
        %s384 = scalar_lea.vmem %s5, %s383
        %s385 = sadd.s32 %s21, 1
        %p386 = scmp.lt.s32.totalorder %s20, 1
        %s387 = scalar_select %p386, %s20, 1
        %p388 = scmp.lt.s32.totalorder %s21, 0
        %s389 = scalar_select %p388, %s21, 0
        %s390 = smul.addr %s387, 2
        %s391 = sadd.s32 %s389, %s390
        %s392 = smul.addr %s391, 4
        %s393 = scalar_lea.vmem %s4, %s392
        %p394 = scmp.lt.s32.totalorder %s20, 1
        %s395 = scalar_select %p394, %s20, 1
        %p396 = scmp.lt.s32.totalorder %s21, 0
        %s397 = scalar_select %p396, %s21, 0
        %s398 = smul.addr %s395, 2
        %s399 = sadd.s32 %s397, %s398
        %s400 = smul.addr %s399, 4
        %s401 = scalar_lea.vmem %s5, %s400
        %v403 = vld [vmem:[%s338] sm:$0xf]
        %v404 = vld [vmem:[%s338 + $0x4] sm:$0xf]
        %v405 = vld [vmem:[%s2] sm:$0xf]
        %v406 = vld [vmem:[%s2 + $0x4] sm:$0xf]
        %v407 = vld [vmem:[%s345] sm:$0xf]
        %v408 = vld [vmem:[%s345 + $0x4] sm:$0xf]
        %v411 = vunpack.c.l.b16 %v403
        %v412 = vunpack.c.l.b16 %v404
        %v413 = vpack.c.b16 %v412, %v411
        %v416 = vunpack.c.l.b16 %v407
        %v417 = vunpack.c.l.b16 %v408
        %v418 = vpack.c.b16 %v417, %v416
        %s419 = scalar_lea.vmem %s2, 8
        %v420 = vld [vmem:[%s419] sm:$0xf]
        %v421 = vld [vmem:[%s419 + $0x4] sm:$0xf]
        %v424 = vunpack.c.l.b16 %v420
        %v425 = vunpack.c.l.b16 %v421
        %v426 = vpack.c.b16 %v425, %v424
        %427 = vrot.lane.b32.xlu0 %v413, 127
        %v428 = vpop.permute.xlu0 %427
        %429 = vrot.lane.b32.xlu0 %v418, 127
        %v430 = vpop.permute.xlu0 %429
        %vm431 = vcmask 1039360
        %v432 = vsel %vm431, %v428, %v430
        %vm434 = vcmask 130048
        %v436 = vsel %vm434, %v426, 0
        %438 = vmatprep.subr.bf16.mxu0 0
        %439 = vmatpush1.bf16.msra.mxu0 0
        %440 = vmatprep.subr.bf16.mxu0 0
        %441 = vmatpush1.bf16.msra.mxu0 0
        %442 = vmatprep.subr.bf16.mxu0 0
        %443 = vmatpush1.bf16.msra.mxu0 0
        %444 = vmatprep.subr.bf16.mxu0 0
        %445 = vmatpush1.bf16.msra.mxu0 0
        %446 = vmatprep.subr.bf16.mxu0 0
        %447 = vmatpush1.bf16.msra.mxu0 0
        %448 = vmatprep.subr.bf16.mxu0 0
        %449 = vmatpush1.bf16.msra.mxu0 0
        %450 = vmatprep.subr.bf16.mxu0 0
        %451 = vmatpush1.bf16.msra.mxu0 0
        %452 = vmatprep.subr.bf16.mxu0 0
        %453 = vmatpush1.bf16.msra.mxu0 %v432
        %454 = vmatprep.subr.bf16.mxu0 0
        %455 = vmatpush2.bf16.msra.mxu0 0
        %456 = vmatprep.subr.bf16.mxu0 0
        %457 = vmatpush2.bf16.msra.mxu0 0
        %458 = vmatprep.subr.bf16.mxu0 0
        %459 = vmatpush2.bf16.msra.mxu0 0
        %460 = vmatprep.subr.bf16.mxu0 0
        %461 = vmatpush2.bf16.msra.mxu0 0
        %462 = vmatprep.subr.bf16.mxu0 0
        %463 = vmatpush2.bf16.msra.mxu0 0
        %464 = vmatprep.subr.bf16.mxu0 0
        %465 = vmatpush2.bf16.msra.mxu0 0
        %466 = vmatprep.subr.bf16.mxu0 0
        %467 = vmatpush2.bf16.msra.mxu0 0
        %468 = vmatprep.subr.bf16.mxu0 0
        %469 = vmatpush2.bf16.msra.mxu0 0
        %470 = vmatprep.mubr.bf16.mxu0 0
        %471 = vmatmul.mubr.bf16.gmra.mxu0 %v436
        %v472 = vpop.f32.mrf.mxu0
        %v473 = vadd.f32 0.0, %v472
        %v474 = vpop.f32.mrf.mxu0
        %v475 = vpop.f32.mrf.mxu0
        %v476 = vadd.f32 0.0, %v475
        %v477 = vpop.f32.mrf.mxu0
        %478 = vdwg.mxu0
        %v481 = vunpack.c.l.b16 %v405
        %v482 = vunpack.c.l.b16 %v406
        %v483 = vpack.c.b16 %v482, %v481
        %v486 = vsel %vm434, %v483, 0
        %488 = vmatprep.subr.bf16.mxu0 0
        %489 = vmatpush1.bf16.msra.mxu0 0
        %490 = vmatprep.subr.bf16.mxu0 0
        %491 = vmatpush1.bf16.msra.mxu0 0
        %492 = vmatprep.subr.bf16.mxu0 0
        %493 = vmatpush1.bf16.msra.mxu0 0
        %494 = vmatprep.subr.bf16.mxu0 0
        %495 = vmatpush1.bf16.msra.mxu0 0
        %496 = vmatprep.subr.bf16.mxu0 0
        %497 = vmatpush1.bf16.msra.mxu0 0
        %498 = vmatprep.subr.bf16.mxu0 0
        %499 = vmatpush1.bf16.msra.mxu0 0
        %500 = vmatprep.subr.bf16.mxu0 0
        %501 = vmatpush1.bf16.msra.mxu0 0
        %502 = vmatprep.subr.bf16.mxu0 0
        %503 = vmatpush1.bf16.msra.mxu0 %v413
        %504 = vmatprep.subr.bf16.mxu0 0
        %505 = vmatpush2.bf16.msra.mxu0 0
        %506 = vmatprep.subr.bf16.mxu0 0
        %507 = vmatpush2.bf16.msra.mxu0 0
        %508 = vmatprep.subr.bf16.mxu0 0
        %509 = vmatpush2.bf16.msra.mxu0 0
        %510 = vmatprep.subr.bf16.mxu0 0
        %511 = vmatpush2.bf16.msra.mxu0 0
        %512 = vmatprep.subr.bf16.mxu0 0
        %513 = vmatpush2.bf16.msra.mxu0 0
        %514 = vmatprep.subr.bf16.mxu0 0
        %515 = vmatpush2.bf16.msra.mxu0 0
        %516 = vmatprep.subr.bf16.mxu0 0
        %517 = vmatpush2.bf16.msra.mxu0 0
        %518 = vmatprep.subr.bf16.mxu0 0
        %519 = vmatpush2.bf16.msra.mxu0 0
        %520 = vmatprep.mubr.bf16.mxu0 0
        %521 = vmatmul.mubr.bf16.gmra.mxu0 %v486
        %v522 = vpop.f32.mrf.mxu0
        %v523 = vadd.f32 %v473, %v522
        %v524 = vpop.f32.mrf.mxu0
        %v525 = vpop.f32.mrf.mxu0
        %v526 = vadd.f32 %v476, %v525
        %v527 = vpop.f32.mrf.mxu0
        %528 = vdwg.mxu0
        %s529 = scalar_lea.vmem %s2, 16
        %v530 = vld [vmem:[%s529] sm:$0xf]
        %v531 = vld [vmem:[%s529 + $0x4] sm:$0xf]
        %v534 = vunpack.c.l.b16 %v530
        %v535 = vunpack.c.l.b16 %v531
        %v536 = vpack.c.b16 %v535, %v534
        %537 = vrot.lane.b32.xlu0 %v413, 126
        %v538 = vpop.permute.xlu0 %537
        %539 = vrot.lane.b32.xlu0 %v418, 126
        %v540 = vpop.permute.xlu0 %539
        %vm541 = vcmask 1031168
        %v542 = vsel %vm541, %v538, %v540
        %v545 = vsel %vm434, %v536, 0
        %547 = vmatprep.subr.bf16.mxu0 0
        %548 = vmatpush1.bf16.msra.mxu0 0
        %549 = vmatprep.subr.bf16.mxu0 0
        %550 = vmatpush1.bf16.msra.mxu0 0
        %551 = vmatprep.subr.bf16.mxu0 0
        %552 = vmatpush1.bf16.msra.mxu0 0
        %553 = vmatprep.subr.bf16.mxu0 0
        %554 = vmatpush1.bf16.msra.mxu0 0
        %555 = vmatprep.subr.bf16.mxu0 0
        %556 = vmatpush1.bf16.msra.mxu0 0
        %557 = vmatprep.subr.bf16.mxu0 0
        %558 = vmatpush1.bf16.msra.mxu0 0
        %559 = vmatprep.subr.bf16.mxu0 0
        %560 = vmatpush1.bf16.msra.mxu0 0
        %561 = vmatprep.subr.bf16.mxu0 0
        %562 = vmatpush1.bf16.msra.mxu0 %v542
        %563 = vmatprep.subr.bf16.mxu0 0
        %564 = vmatpush2.bf16.msra.mxu0 0
        %565 = vmatprep.subr.bf16.mxu0 0
        %566 = vmatpush2.bf16.msra.mxu0 0
        %567 = vmatprep.subr.bf16.mxu0 0
        %568 = vmatpush2.bf16.msra.mxu0 0
        %569 = vmatprep.subr.bf16.mxu0 0
        %570 = vmatpush2.bf16.msra.mxu0 0
        %571 = vmatprep.subr.bf16.mxu0 0
        %572 = vmatpush2.bf16.msra.mxu0 0
        %573 = vmatprep.subr.bf16.mxu0 0
        %574 = vmatpush2.bf16.msra.mxu0 0
        %575 = vmatprep.subr.bf16.mxu0 0
        %576 = vmatpush2.bf16.msra.mxu0 0
        %577 = vmatprep.subr.bf16.mxu0 0
        %578 = vmatpush2.bf16.msra.mxu0 0
        %579 = vmatprep.mubr.bf16.mxu0 0
        %580 = vmatmul.mubr.bf16.gmra.mxu0 %v545
        %v581 = vpop.f32.mrf.mxu0
        %v582 = vadd.f32 0.0, %v581
        %v583 = vpop.f32.mrf.mxu0
        %v584 = vpop.f32.mrf.mxu0
        %v585 = vadd.f32 0.0, %v584
        %v586 = vpop.f32.mrf.mxu0
        %587 = vdwg.mxu0
        %v588 = vadd.f32 %v523, %v582
        %v589 = vadd.f32 %v526, %v585
        %v590 = vld [vmem:[%s3] sm:$0xff]
        %v591 = vld [vmem:[%s3 + $0x8] sm:$0xff]
        %593 = vset.pattern.permute.xlu0 0
        %594 = vperm.xlu0 %593, %v590
        %v595 = vpop.permute.xlu0 %594
        %598 = vset.pattern.permute.xlu0 0
        %599 = vperm.xlu0 %598, %v591
        %v600 = vpop.permute.xlu0 %599
        %v602 = vadd.f32 %v588, %v595
        %v603 = vadd.f32 %v589, %v600
        %v604 = vld [vmem:[%s393] sm:$0xf]
        %v605 = vld [vmem:[%s393 + $0x4] sm:$0xf]
        %v606 = vunpack.c.l.bf16 %v604
        %v607 = vunpack.c.l.bf16 %v605
        %v608 = vadd.f32 %v602, %v606
        %v609 = vadd.f32 %v603, %v607
        %v610 = vpack.c.bf16 %v609, %v608
        %v612 = vunpack.c.l.b16 %v610
        %v613 = vunpack.c.h.b16 %v610
        %v614 = vpack.c.b16 %v612, %v612
        %v615 = vpack.c.b16 %v613, %v613
        %618 = vst [vmem:[%s401] sm:$0xf] %v614
        %619 = vst [vmem:[%s401 + $0x4] sm:$0xf] %v615
        %p620 = scmp.lt.s32.totalorder %s20, 1
        %s621 = scalar_select %p620, %s20, 1
        %p622 = scmp.lt.s32.totalorder %s21, 0
        %s623 = scalar_select %p622, %s21, 0
        %s624 = smul.addr %s621, 2
        %s625 = sadd.s32 %s623, %s624
        %s626 = smul.addr %s625, 4
        %s627 = scalar_lea.vmem %s5, %s626
        // Predicated region
        $region123: #{_lambda_.14} parent=113 // pred_check
          %p628 = pneg %p176
        $region124: #{_lambda_.14} parent=113 // pred_check_branch
          %630 = sbr.rel (%p628) target = $region126
        $region125: #{_lambda_.14} parent=113 // pred_region
          _
        $region126: #{_lambda_.14} parent=113 // pred_fallthru
          _
      $region114: #{_lambda_.14} parent=5 // pred_fallthru
        _
      %p631 = scmp.le.s32.totalorder 2, %s11
      // Predicated region
      $region127: #{_lambda_.14} parent=5 // pred_check
        %p632 = pneg %p631
      $region128: #{_lambda_.14} parent=5 // pred_check_branch
        %634 = sbr.rel (%p632) target = $region130
      $region129: #{_lambda_.14} parent=5 // pred_region
        %s635 = ssub.s32 %s11, 2
        // Predicated region
        $region131: #{_lambda_.14} parent=129 // pred_check
          %p636 = pneg %p182
        $region132: #{_lambda_.14} parent=129 // pred_check_branch
          %638 = sbr.rel (%p636) target = $region134
        $region133: #{_lambda_.14} parent=129 // pred_region
          %p639 = scmp.lt.s32.totalorder %s22, 1
          %s640 = scalar_select %p639, %s22, 1
          %p641 = scmp.lt.s32.totalorder %s23, 0
          %s642 = scalar_select %p641, %s23, 0
          %s643 = smul.addr %s640, 2
          %s644 = sadd.s32 %s642, %s643
          %s645 = smul.addr %s644, 4
          %s646 = scalar_lea.vmem %s5, %s645
        $region134: #{_lambda_.14} parent=129 // pred_fallthru
          _
      $region130: #{_lambda_.14} parent=5 // pred_fallthru
        _
    $region6: #{_lambda_.14} parent=1 // loop_footer
      %s15 = sadd.s32 1, %s11
    $region7: #{_lambda_.14} parent=1 // loop_footer_branch
      %10 = sbr.rel target = $region3
    $region8: #{_lambda_.14} parent=1 // loop_exit
      _

// kernel: _lambda_.15
$region0: #{_lambda_.15}
  #allocation0 [shape = 'u32[]', space=smem, size = 0x4, offset = 0x4, fixed_abs, tag = 'smem constant byte address 0x4 - core index']
  #allocation1 [shape = 'u32[144,128]{1,0:T(1,128)}', space=vmem, size = 0x12000, scoped, tag = 'internal scratch']
  %s0 = inlined_call_operand.vmem [shape: bf16[2,16,256], index: 0, kind: input, shape index: {}, may-alias: {0,1}]
  %s1 = inlined_call_operand.vmem [shape: bf16[2,16,256], index: 1, kind: input, shape index: {}, may-alias: {0,1}]
  %s2 = inlined_call_operand.vmem [shape: bf16[2,16,16], index: 2, kind: input, shape index: {}]
  %s3 = inlined_call_operand.vmem [shape: f32[16,1], index: 3, kind: input, shape index: {}]
  %s4 = inlined_call_operand.vmem [shape: bf16[2,16,128], index: 4, kind: output, shape index: {}]
  %s5 = sld [smem:[#allocation0]]
  $region131: #{_lambda_.15} parent=0
    _
  %s7 = ssub.s32 1, %s5
  %s8 = scalar_select 0, %s7, %s5
  $region1: #{_lambda_.15} parent=0
    #allocation2 [shape = 'u8[8192]{0}', space=vmem, size = 0x2000, scoped, tag = 'input window, operand 0']
    #allocation3 [shape = 'u8[8192]{0}', space=vmem, size = 0x2000, scoped, tag = 'input window, operand 1']
    loop: start=0, step=1, limit=4
    $region2: #{_lambda_.15} parent=1 // loop_pre_header
      _
    $region3: #{_lambda_.15} parent=1 // loop_header
      %s10 = sphi 0, %s14
      %p11 = scmp.ge.s32.totalorder %s10, 4
      %s17 = sphi 0, %s29
      %s18 = sphi 0, %s25
      %s19 = sphi 0, %s17
      %s20 = sphi 0, %s18
      %s21 = sphi 0, %s19
      %s22 = sphi 0, %s20
      %s34 = sphi 0, %s36
      %s37 = sphi 0, %s34
      %s38 = sphi 0, %s37
      %s54 = sphi 0, %s38
      %s64 = sphi 0, %s66
      %s67 = sphi 0, %s64
      %s68 = sphi 0, %s67
      %s84 = sphi 0, %s68
      %s88 = sphi 0, %s88
      %s90 = sphi 0, %s88
      %s91 = sphi 0, %s90
      %s105 = sphi 0, %s91
      %s109 = sphi 0, %s109
      %s111 = sphi 0, %s109
      %s112 = sphi 0, %s111
      %s126 = sphi 0, %s112
      %s134 = sphi 0, %s136
      %s137 = sphi 0, %s134
      %s138 = sphi 0, %s137
      %s154 = sphi 0, %s138
    $region4: #{_lambda_.15} parent=1 // loop_header_branch
      %13 = sbr.rel (%p11) target = $region8
    $region5: #{_lambda_.15} parent=1 // loop_body
      %s15 = ssub.s32 %s10, 1
      %s16 = ssub.s32 %s10, 2
      %s23 = sadd.s32 1, %s18
      %p24 = scmp.ge.s32.totalorder %s23, 1
      %s25 = scalar_select %p24, 0, %s23
      %s26 = sadd.s32 1, %s17
      %s27 = scalar_select %p24, %s26, %s17
      %p28 = scmp.ge.s32.totalorder %s27, 2
      %s29 = scalar_select %p28, 0, %s27
      %s30 = ssub.s32 %s17, %s29
      %s31 = ssub.s32 %s18, %s25
      %s32 = sor.u32 %s30, %s31
      %p33 = scmp.eq.s32.totalorder %s32, 0
      %s35 = sadd.s32 %s34, 1
      %s36 = scalar_select %p33, %s34, %s35
      %p39 = pneg %p33
      %p40 = scmp.eq.s32.totalorder %s10, 1
      %p41 = por %p39, %p40
      %p42 = scmp.ne.s32.totalorder %s34, %s37
      %p43 = scmp.eq.s32.totalorder %s10, 0
      %p44 = por %p42, %p43
      %p45 = scmp.ne.s32.totalorder %s34, %s37
      %p46 = scmp.eq.s32.totalorder %s15, 1
      %p47 = por %p45, %p46
      %p48 = scmp.ne.s32.totalorder %s37, %s38
      %p49 = scmp.eq.s32.totalorder %s15, 0
      %p50 = por %p48, %p49
      %p51 = scmp.ne.s32.totalorder %s37, %s38
      %p52 = scmp.eq.s32.totalorder %s16, 1
      %p53 = por %p51, %p52
      %p55 = scmp.ne.s32.totalorder %s38, %s54
      %p56 = scmp.eq.s32.totalorder %s16, 0
      %p57 = por %p55, %p56
      %s58 = sadd.s32 %s18, 1
      %s59 = sadd.s32 %s25, 1
      %s60 = ssub.s32 %s17, %s29
      %s61 = ssub.s32 %s58, %s59
      %s62 = sor.u32 %s60, %s61
      %p63 = scmp.eq.s32.totalorder %s62, 0
      %s65 = sadd.s32 %s64, 1
      %s66 = scalar_select %p63, %s64, %s65
      %p69 = pneg %p63
      %p70 = scmp.eq.s32.totalorder %s10, 1
      %p71 = por %p69, %p70
      %p72 = scmp.ne.s32.totalorder %s64, %s67
      %p73 = scmp.eq.s32.totalorder %s10, 0
      %p74 = por %p72, %p73
      %p75 = scmp.ne.s32.totalorder %s64, %s67
      %p76 = scmp.eq.s32.totalorder %s15, 1
      %p77 = por %p75, %p76
      %p78 = scmp.ne.s32.totalorder %s67, %s68
      %p79 = scmp.eq.s32.totalorder %s15, 0
      %p80 = por %p78, %p79
      %p81 = scmp.ne.s32.totalorder %s67, %s68
      %p82 = scmp.eq.s32.totalorder %s16, 1
      %p83 = por %p81, %p82
      %p85 = scmp.ne.s32.totalorder %s68, %s84
      %p86 = scmp.eq.s32.totalorder %s16, 0
      %p87 = por %p85, %p86
      %s89 = sadd.s32 %s88, 1
      %p92 = scmp.eq.s32.totalorder %s10, 1
      %p93 = scmp.ne.s32.totalorder %s88, %s90
      %p94 = scmp.eq.s32.totalorder %s10, 0
      %p95 = por %p93, %p94
      %p96 = scmp.ne.s32.totalorder %s88, %s90
      %p97 = scmp.eq.s32.totalorder %s15, 1
      %p98 = por %p96, %p97
      %p99 = scmp.ne.s32.totalorder %s90, %s91
      %p100 = scmp.eq.s32.totalorder %s15, 0
      %p101 = por %p99, %p100
      %p102 = scmp.ne.s32.totalorder %s90, %s91
      %p103 = scmp.eq.s32.totalorder %s16, 1
      %p104 = por %p102, %p103
      %p106 = scmp.ne.s32.totalorder %s91, %s105
      %p107 = scmp.eq.s32.totalorder %s16, 0
      %p108 = por %p106, %p107
      %s110 = sadd.s32 %s109, 1
      %p113 = scmp.eq.s32.totalorder %s10, 1
      %p114 = scmp.ne.s32.totalorder %s109, %s111
      %p115 = scmp.eq.s32.totalorder %s10, 0
      %p116 = por %p114, %p115
      %p117 = scmp.ne.s32.totalorder %s109, %s111
      %p118 = scmp.eq.s32.totalorder %s15, 1
      %p119 = por %p117, %p118
      %p120 = scmp.ne.s32.totalorder %s111, %s112
      %p121 = scmp.eq.s32.totalorder %s15, 0
      %p122 = por %p120, %p121
      %p123 = scmp.ne.s32.totalorder %s111, %s112
      %p124 = scmp.eq.s32.totalorder %s16, 1
      %p125 = por %p123, %p124
      %p127 = scmp.ne.s32.totalorder %s112, %s126
      %p128 = scmp.eq.s32.totalorder %s16, 0
      %p129 = por %p127, %p128
      %s130 = ssub.s32 %s17, %s29
      %s131 = ssub.s32 %s18, %s25
      %s132 = sor.u32 %s130, %s131
      %p133 = scmp.eq.s32.totalorder %s132, 0
      %s135 = sadd.s32 %s134, 1
      %s136 = scalar_select %p133, %s134, %s135
      %p139 = pneg %p133
      %p140 = scmp.eq.s32.totalorder %s10, 1
      %p141 = por %p139, %p140
      %p142 = scmp.ne.s32.totalorder %s134, %s137
      %p143 = scmp.eq.s32.totalorder %s10, 0
      %p144 = por %p142, %p143
      %p145 = scmp.ne.s32.totalorder %s134, %s137
      %p146 = scmp.eq.s32.totalorder %s15, 1
      %p147 = por %p145, %p146
      %p148 = scmp.ne.s32.totalorder %s137, %s138
      %p149 = scmp.eq.s32.totalorder %s15, 0
      %p150 = por %p148, %p149
      %p151 = scmp.ne.s32.totalorder %s137, %s138
      %p152 = scmp.eq.s32.totalorder %s16, 1
      %p153 = por %p151, %p152
      %p155 = scmp.ne.s32.totalorder %s138, %s154
      %p156 = scmp.eq.s32.totalorder %s16, 0
      %p157 = por %p155, %p156
      %p158 = scmp.le.s32.totalorder 1, %s10
      %p159 = scmp.lt.s32.totalorder %s10, 3
      %p160 = pnand %p158, %p159
      %p161 = pneg %p160
      // Predicated region
      $region9: #{_lambda_.15} parent=5 // pred_check
        _
      $region10: #{_lambda_.15} parent=5 // pred_check_branch
        %163 = sbr.rel (%p160) target = $region12
      $region11: #{_lambda_.15} parent=5 // pred_region
        %s164 = ssub.s32 %s10, 1
        // Predicated region
        $region13: #{_lambda_.15} parent=11 // pred_check
          %p165 = pneg %p101
        $region14: #{_lambda_.15} parent=11 // pred_check_branch
          %167 = sbr.rel (%p165) target = $region16
        $region15: #{_lambda_.15} parent=11 // pred_region
          _
        $region16: #{_lambda_.15} parent=11 // pred_fallthru
          _
        // Predicated region
        $region17: #{_lambda_.15} parent=11 // pred_check
          %p168 = pneg %p122
        $region18: #{_lambda_.15} parent=11 // pred_check_branch
          %170 = sbr.rel (%p168) target = $region20
        $region19: #{_lambda_.15} parent=11 // pred_region
          _
        $region20: #{_lambda_.15} parent=11 // pred_fallthru
          _
      $region12: #{_lambda_.15} parent=5 // pred_fallthru
        _
      %p171 = scmp.lt.s32.totalorder %s10, 2
      // Predicated region
      $region21: #{_lambda_.15} parent=5 // pred_check
        %p172 = pneg %p171
      $region22: #{_lambda_.15} parent=5 // pred_check_branch
        %174 = sbr.rel (%p172) target = $region24
      $region23: #{_lambda_.15} parent=5 // pred_region
        // Predicated region
        $region25: #{_lambda_.15} parent=23 // pred_check
          %p175 = pneg %p44
        $region26: #{_lambda_.15} parent=23 // pred_check_branch
          %177 = sbr.rel (%p175) target = $region28
        $region27: #{_lambda_.15} parent=23 // pred_region
          %s178 = sand.u32 %s34, 1
          %s179 = sand.u32 %s34, 1
          %s180 = smul.addr %s179, 8
          %s181 = scalar_lea.vmem [#allocation2], %s180
          %s182 = smul.addr %s17, 4
          %s183 = sadd.s32 %s18, %s182
          %s184 = smul.addr %s183, 4
          %s185 = scalar_lea.vmem %s0, %s184
          // Predicated region
          $region29: #{_lambda_.15} parent=27 // pred_check
            _
          $region30: #{_lambda_.15} parent=27 // pred_check_branch
            %187 = sbr.rel (0) target = $region32
          $region31: #{_lambda_.15} parent=27 // pred_region
            // Predicated region
            $region33: #{_lambda_.15} parent=31 // pred_check
              _
            $region34: #{_lambda_.15} parent=31 // pred_check_branch
              %189 = sbr.rel target = $region36
            $region35: #{_lambda_.15} parent=31 // pred_region
              // Predicated region
              $region48: #{_lambda_.15} parent=35 // pred_check
                _
              $region49: #{_lambda_.15} parent=35 // pred_check_branch
                %207 = sbr.rel (0) target = $region51
              $region50: #{_lambda_.15} parent=35 // pred_region
                loop: start=0, step=1, limit=1
                $region52: #{_lambda_.15} parent=50 // loop_pre_header
                  _
                $region53: #{_lambda_.15} parent=50 // loop_header
                  %s209 = sphi 0, %s213
                  %p210 = scmp.ge.s32.totalorder %s209, 1
                  %s214 = sphi %s185, %s185
                  %s215 = sphi %s181, %s181
                $region54: #{_lambda_.15} parent=50 // loop_header_branch
                  %212 = sbr.rel (%p210) target = $region58
                $region55: #{_lambda_.15} parent=50 // loop_body
                  _
                $region56: #{_lambda_.15} parent=50 // loop_footer
                  %s213 = sadd.s32 1, %s209
                $region57: #{_lambda_.15} parent=50 // loop_footer_branch
                  %208 = sbr.rel target = $region53
                $region58: #{_lambda_.15} parent=50 // loop_exit
                  _
                %s217 = ssub.s32 16, 1
                loop: start=0, step=1, limit=1
                $region59: #{_lambda_.15} parent=50 // loop_pre_header
                  _
                $region60: #{_lambda_.15} parent=50 // loop_header
                  %s219 = sphi 0, %s223
                  %p220 = scmp.ge.s32.totalorder %s219, 1
                  %s224 = sphi %s185, %s185
                  %s225 = sphi %s181, %s181
                $region61: #{_lambda_.15} parent=50 // loop_header_branch
                  %222 = sbr.rel (%p220) target = $region65
                $region62: #{_lambda_.15} parent=50 // loop_body
                  %v226 = vld [vmem:[%s224] sm:%s217]
                  %227 = vst [vmem:[%s225] sm:%s217] %v226
                  %v228 = vld [vmem:[%s224 + $0x8] sm:%s217]
                  %229 = vst [vmem:[%s225 + $0x4] sm:%s217] %v228
                $region63: #{_lambda_.15} parent=50 // loop_footer
                  %s223 = sadd.s32 1, %s219
                $region64: #{_lambda_.15} parent=50 // loop_footer_branch
                  %218 = sbr.rel target = $region60
                $region65: #{_lambda_.15} parent=50 // loop_exit
                  _
              $region51: #{_lambda_.15} parent=35 // pred_fallthru
                _
            $region36: #{_lambda_.15} parent=31 // pred_fallthru
              _
            // Predicated region
            $region37: #{_lambda_.15} parent=31 // pred_check
              _
            $region38: #{_lambda_.15} parent=31 // pred_check_branch
              %191 = sbr.rel (0) target = $region40
            $region39: #{_lambda_.15} parent=31 // pred_region
              %s193 = ssub.s32 16, 1
              loop: start=0, step=1, limit=1
              $region41: #{_lambda_.15} parent=39 // loop_pre_header
                _
              $region42: #{_lambda_.15} parent=39 // loop_header
                %s195 = sphi 0, %s199
                %p196 = scmp.ge.s32.totalorder %s195, 1
                %s200 = sphi %s185, %s185
                %s201 = sphi %s181, %s181
              $region43: #{_lambda_.15} parent=39 // loop_header_branch
                %198 = sbr.rel (%p196) target = $region47
              $region44: #{_lambda_.15} parent=39 // loop_body
                %v202 = vld [vmem:[%s200] sm:%s193]
                %203 = vst [vmem:[%s201] sm:%s193] %v202
                %v204 = vld [vmem:[%s200 + $0x8] sm:%s193]
                %205 = vst [vmem:[%s201 + $0x4] sm:%s193] %v204
              $region45: #{_lambda_.15} parent=39 // loop_footer
                %s199 = sadd.s32 1, %s195
              $region46: #{_lambda_.15} parent=39 // loop_footer_branch
                %194 = sbr.rel target = $region42
              $region47: #{_lambda_.15} parent=39 // loop_exit
                _
            $region40: #{_lambda_.15} parent=31 // pred_fallthru
              _
          $region32: #{_lambda_.15} parent=27 // pred_fallthru
            _
          %230 = vnop
        $region28: #{_lambda_.15} parent=23 // pred_fallthru
          _
        // Predicated region
        $region66: #{_lambda_.15} parent=23 // pred_check
          %p231 = pneg %p74
        $region67: #{_lambda_.15} parent=23 // pred_check_branch
          %233 = sbr.rel (%p231) target = $region69
        $region68: #{_lambda_.15} parent=23 // pred_region
          %s234 = sand.u32 %s64, 1
          %s235 = sand.u32 %s64, 1
          %s236 = smul.addr %s235, 8
          %s237 = scalar_lea.vmem [#allocation3], %s236
          %s238 = sadd.s32 %s18, 1
          %s239 = smul.addr %s17, 4
          %s240 = sadd.s32 %s238, %s239
          %s241 = smul.addr %s240, 4
          %s242 = scalar_lea.vmem %s1, %s241
          // Predicated region
          $region70: #{_lambda_.15} parent=68 // pred_check
            _
          $region71: #{_lambda_.15} parent=68 // pred_check_branch
            %244 = sbr.rel (0) target = $region73
          $region72: #{_lambda_.15} parent=68 // pred_region
            // Predicated region
            $region74: #{_lambda_.15} parent=72 // pred_check
              _
            $region75: #{_lambda_.15} parent=72 // pred_check_branch
              %246 = sbr.rel target = $region77
            $region76: #{_lambda_.15} parent=72 // pred_region
              // Predicated region
              $region89: #{_lambda_.15} parent=76 // pred_check
                _
              $region90: #{_lambda_.15} parent=76 // pred_check_branch
                %264 = sbr.rel (0) target = $region92
              $region91: #{_lambda_.15} parent=76 // pred_region
                loop: start=0, step=1, limit=1
                $region93: #{_lambda_.15} parent=91 // loop_pre_header
                  _
                $region94: #{_lambda_.15} parent=91 // loop_header
                  %s266 = sphi 0, %s270
                  %p267 = scmp.ge.s32.totalorder %s266, 1
                  %s271 = sphi %s242, %s242
                  %s272 = sphi %s237, %s237
                $region95: #{_lambda_.15} parent=91 // loop_header_branch
                  %269 = sbr.rel (%p267) target = $region99
                $region96: #{_lambda_.15} parent=91 // loop_body
                  _
                $region97: #{_lambda_.15} parent=91 // loop_footer
                  %s270 = sadd.s32 1, %s266
                $region98: #{_lambda_.15} parent=91 // loop_footer_branch
                  %265 = sbr.rel target = $region94
                $region99: #{_lambda_.15} parent=91 // loop_exit
                  _
                %s274 = ssub.s32 16, 1
                loop: start=0, step=1, limit=1
                $region100: #{_lambda_.15} parent=91 // loop_pre_header
                  _
                $region101: #{_lambda_.15} parent=91 // loop_header
                  %s276 = sphi 0, %s280
                  %p277 = scmp.ge.s32.totalorder %s276, 1
                  %s281 = sphi %s242, %s242
                  %s282 = sphi %s237, %s237
                $region102: #{_lambda_.15} parent=91 // loop_header_branch
                  %279 = sbr.rel (%p277) target = $region106
                $region103: #{_lambda_.15} parent=91 // loop_body
                  %v283 = vld [vmem:[%s281] sm:%s274]
                  %284 = vst [vmem:[%s282] sm:%s274] %v283
                  %v285 = vld [vmem:[%s281 + $0x8] sm:%s274]
                  %286 = vst [vmem:[%s282 + $0x4] sm:%s274] %v285
                $region104: #{_lambda_.15} parent=91 // loop_footer
                  %s280 = sadd.s32 1, %s276
                $region105: #{_lambda_.15} parent=91 // loop_footer_branch
                  %275 = sbr.rel target = $region101
                $region106: #{_lambda_.15} parent=91 // loop_exit
                  _
              $region92: #{_lambda_.15} parent=76 // pred_fallthru
                _
            $region77: #{_lambda_.15} parent=72 // pred_fallthru
              _
            // Predicated region
            $region78: #{_lambda_.15} parent=72 // pred_check
              _
            $region79: #{_lambda_.15} parent=72 // pred_check_branch
              %248 = sbr.rel (0) target = $region81
            $region80: #{_lambda_.15} parent=72 // pred_region
              %s250 = ssub.s32 16, 1
              loop: start=0, step=1, limit=1
              $region82: #{_lambda_.15} parent=80 // loop_pre_header
                _
              $region83: #{_lambda_.15} parent=80 // loop_header
                %s252 = sphi 0, %s256
                %p253 = scmp.ge.s32.totalorder %s252, 1
                %s257 = sphi %s242, %s242
                %s258 = sphi %s237, %s237
              $region84: #{_lambda_.15} parent=80 // loop_header_branch
                %255 = sbr.rel (%p253) target = $region88
              $region85: #{_lambda_.15} parent=80 // loop_body
                %v259 = vld [vmem:[%s257] sm:%s250]
                %260 = vst [vmem:[%s258] sm:%s250] %v259
                %v261 = vld [vmem:[%s257 + $0x8] sm:%s250]
                %262 = vst [vmem:[%s258 + $0x4] sm:%s250] %v261
              $region86: #{_lambda_.15} parent=80 // loop_footer
                %s256 = sadd.s32 1, %s252
              $region87: #{_lambda_.15} parent=80 // loop_footer_branch
                %251 = sbr.rel target = $region83
              $region88: #{_lambda_.15} parent=80 // loop_exit
                _
            $region81: #{_lambda_.15} parent=72 // pred_fallthru
              _
          $region73: #{_lambda_.15} parent=68 // pred_fallthru
            _
          %287 = vnop
        $region69: #{_lambda_.15} parent=23 // pred_fallthru
          _
      $region24: #{_lambda_.15} parent=5 // pred_fallthru
        _
      %p288 = scmp.le.s32.totalorder 1, %s10
      %p289 = scmp.lt.s32.totalorder %s10, 3
      %p290 = pnand %p288, %p289
      %p291 = pneg %p290
      // Predicated region
      $region107: #{_lambda_.15} parent=5 // pred_check
        _
      $region108: #{_lambda_.15} parent=5 // pred_check_branch
        %293 = sbr.rel (%p290) target = $region110
      $region109: #{_lambda_.15} parent=5 // pred_region
        %s294 = ssub.s32 %s10, 1
        %s295 = sand.u32 %s37, 1
        %s296 = sand.u32 %s37, 1
        %s297 = smul.addr %s296, 8
        %s298 = scalar_lea.vmem [#allocation2], %s297
        // Predicated region
        $region111: #{_lambda_.15} parent=109 // pred_check
          %p299 = pneg %p50
        $region112: #{_lambda_.15} parent=109 // pred_check_branch
          %301 = sbr.rel (%p299) target = $region114
        $region113: #{_lambda_.15} parent=109 // pred_region
          _
        $region114: #{_lambda_.15} parent=109 // pred_fallthru
          _
        %s302 = sand.u32 %s67, 1
        %s303 = sand.u32 %s67, 1
        %s304 = smul.addr %s303, 8
        %s305 = scalar_lea.vmem [#allocation3], %s304
        // Predicated region
        $region115: #{_lambda_.15} parent=109 // pred_check
          %p306 = pneg %p80
        $region116: #{_lambda_.15} parent=109 // pred_check_branch
          %308 = sbr.rel (%p306) target = $region118
        $region117: #{_lambda_.15} parent=109 // pred_region
          _
        $region118: #{_lambda_.15} parent=109 // pred_fallthru
          _
        %s309 = sand.u32 %s37, 1
        %s310 = sand.u32 %s37, 1
        %s311 = smul.addr %s310, 8
        %s312 = scalar_lea.vmem [#allocation2], %s311
        %p313 = pneg %p50
        %p314 = pneg %p47
        %s315 = sand.u32 %s67, 1
        %s316 = sand.u32 %s67, 1
        %s317 = smul.addr %s316, 8
        %s318 = scalar_lea.vmem [#allocation3], %s317
        %p319 = pneg %p80
        %p320 = pneg %p77
        %p321 = pneg %p101
        %p322 = pneg %p98
        %p323 = pneg %p122
        %p324 = pneg %p119
        %p325 = pneg %p150
        %p326 = pneg %p147
        %p327 = scmp.lt.s32.totalorder %s19, 1
        %s328 = scalar_select %p327, %s19, 1
        %p329 = scmp.lt.s32.totalorder %s20, 0
        %s330 = scalar_select %p329, %s20, 0
        %s331 = smul.addr %s328, 2
        %s332 = sadd.s32 %s330, %s331
        %s333 = smul.addr %s332, 4
        %s334 = scalar_lea.vmem %s4, %s333
        %s335 = sadd.s32 %s20, 1
        %p336 = scmp.lt.s32.totalorder %s19, 1
        %s337 = scalar_select %p336, %s19, 1
        %p338 = scmp.lt.s32.totalorder %s20, 0
        %s339 = scalar_select %p338, %s20, 0
        %s340 = smul.addr %s337, 2
        %s341 = sadd.s32 %s339, %s340
        %s342 = smul.addr %s341, 4
        %s343 = scalar_lea.vmem %s4, %s342
        %v345 = vld [vmem:[%s298] sm:$0xf]
        %v346 = vld [vmem:[%s298 + $0x4] sm:$0xf]
        %v347 = vld [vmem:[%s2] sm:$0xf]
        %v348 = vld [vmem:[%s2 + $0x4] sm:$0xf]
        %v349 = vld [vmem:[%s305] sm:$0xf]
        %v350 = vld [vmem:[%s305 + $0x4] sm:$0xf]
        %v353 = vunpack.c.l.b16 %v345
        %v354 = vunpack.c.l.b16 %v346
        %v355 = vpack.c.b16 %v354, %v353
        %v358 = vunpack.c.l.b16 %v349
        %v359 = vunpack.c.l.b16 %v350
        %v360 = vpack.c.b16 %v359, %v358
        %s361 = scalar_lea.vmem %s2, 8
        %v362 = vld [vmem:[%s361] sm:$0xf]
        %v363 = vld [vmem:[%s361 + $0x4] sm:$0xf]
        %v366 = vunpack.c.l.b16 %v362
        %v367 = vunpack.c.l.b16 %v363
        %v368 = vpack.c.b16 %v367, %v366
        %369 = vrot.lane.b32.xlu0 %v355, 127
        %v370 = vpop.permute.xlu0 %369
        %371 = vrot.lane.b32.xlu0 %v360, 127
        %v372 = vpop.permute.xlu0 %371
        %vm373 = vcmask 1039360
        %v374 = vsel %vm373, %v370, %v372
        %vm376 = vcmask 130048
        %v378 = vsel %vm376, %v368, 0
        %380 = vmatprep.subr.bf16.mxu0 0
        %381 = vmatpush1.bf16.msra.mxu0 0
        %382 = vmatprep.subr.bf16.mxu0 0
        %383 = vmatpush1.bf16.msra.mxu0 0
        %384 = vmatprep.subr.bf16.mxu0 0
        %385 = vmatpush1.bf16.msra.mxu0 0
        %386 = vmatprep.subr.bf16.mxu0 0
        %387 = vmatpush1.bf16.msra.mxu0 0
        %388 = vmatprep.subr.bf16.mxu0 0
        %389 = vmatpush1.bf16.msra.mxu0 0
        %390 = vmatprep.subr.bf16.mxu0 0
        %391 = vmatpush1.bf16.msra.mxu0 0
        %392 = vmatprep.subr.bf16.mxu0 0
        %393 = vmatpush1.bf16.msra.mxu0 0
        %394 = vmatprep.subr.bf16.mxu0 0
        %395 = vmatpush1.bf16.msra.mxu0 %v374
        %396 = vmatprep.subr.bf16.mxu0 0
        %397 = vmatpush2.bf16.msra.mxu0 0
        %398 = vmatprep.subr.bf16.mxu0 0
        %399 = vmatpush2.bf16.msra.mxu0 0
        %400 = vmatprep.subr.bf16.mxu0 0
        %401 = vmatpush2.bf16.msra.mxu0 0
        %402 = vmatprep.subr.bf16.mxu0 0
        %403 = vmatpush2.bf16.msra.mxu0 0
        %404 = vmatprep.subr.bf16.mxu0 0
        %405 = vmatpush2.bf16.msra.mxu0 0
        %406 = vmatprep.subr.bf16.mxu0 0
        %407 = vmatpush2.bf16.msra.mxu0 0
        %408 = vmatprep.subr.bf16.mxu0 0
        %409 = vmatpush2.bf16.msra.mxu0 0
        %410 = vmatprep.subr.bf16.mxu0 0
        %411 = vmatpush2.bf16.msra.mxu0 0
        %412 = vmatprep.mubr.bf16.mxu0 0
        %413 = vmatmul.mubr.bf16.gmra.mxu0 %v378
        %v414 = vpop.f32.mrf.mxu0
        %v415 = vadd.f32 0.0, %v414
        %v416 = vpop.f32.mrf.mxu0
        %v417 = vpop.f32.mrf.mxu0
        %v418 = vadd.f32 0.0, %v417
        %v419 = vpop.f32.mrf.mxu0
        %420 = vdwg.mxu0
        %v423 = vunpack.c.l.b16 %v347
        %v424 = vunpack.c.l.b16 %v348
        %v425 = vpack.c.b16 %v424, %v423
        %v428 = vsel %vm376, %v425, 0
        %430 = vmatprep.subr.bf16.mxu0 0
        %431 = vmatpush1.bf16.msra.mxu0 0
        %432 = vmatprep.subr.bf16.mxu0 0
        %433 = vmatpush1.bf16.msra.mxu0 0
        %434 = vmatprep.subr.bf16.mxu0 0
        %435 = vmatpush1.bf16.msra.mxu0 0
        %436 = vmatprep.subr.bf16.mxu0 0
        %437 = vmatpush1.bf16.msra.mxu0 0
        %438 = vmatprep.subr.bf16.mxu0 0
        %439 = vmatpush1.bf16.msra.mxu0 0
        %440 = vmatprep.subr.bf16.mxu0 0
        %441 = vmatpush1.bf16.msra.mxu0 0
        %442 = vmatprep.subr.bf16.mxu0 0
        %443 = vmatpush1.bf16.msra.mxu0 0
        %444 = vmatprep.subr.bf16.mxu0 0
        %445 = vmatpush1.bf16.msra.mxu0 %v355
        %446 = vmatprep.subr.bf16.mxu0 0
        %447 = vmatpush2.bf16.msra.mxu0 0
        %448 = vmatprep.subr.bf16.mxu0 0
        %449 = vmatpush2.bf16.msra.mxu0 0
        %450 = vmatprep.subr.bf16.mxu0 0
        %451 = vmatpush2.bf16.msra.mxu0 0
        %452 = vmatprep.subr.bf16.mxu0 0
        %453 = vmatpush2.bf16.msra.mxu0 0
        %454 = vmatprep.subr.bf16.mxu0 0
        %455 = vmatpush2.bf16.msra.mxu0 0
        %456 = vmatprep.subr.bf16.mxu0 0
        %457 = vmatpush2.bf16.msra.mxu0 0
        %458 = vmatprep.subr.bf16.mxu0 0
        %459 = vmatpush2.bf16.msra.mxu0 0
        %460 = vmatprep.subr.bf16.mxu0 0
        %461 = vmatpush2.bf16.msra.mxu0 0
        %462 = vmatprep.mubr.bf16.mxu0 0
        %463 = vmatmul.mubr.bf16.gmra.mxu0 %v428
        %v464 = vpop.f32.mrf.mxu0
        %v465 = vadd.f32 %v415, %v464
        %v466 = vpop.f32.mrf.mxu0
        %v467 = vpop.f32.mrf.mxu0
        %v468 = vadd.f32 %v418, %v467
        %v469 = vpop.f32.mrf.mxu0
        %470 = vdwg.mxu0
        %v471 = vld [vmem:[%s3] sm:$0xff]
        %v472 = vld [vmem:[%s3 + $0x8] sm:$0xff]
        %474 = vset.pattern.permute.xlu0 0
        %475 = vperm.xlu0 %474, %v471
        %v476 = vpop.permute.xlu0 %475
        %479 = vset.pattern.permute.xlu0 0
        %480 = vperm.xlu0 %479, %v472
        %v481 = vpop.permute.xlu0 %480
        %v483 = vadd.f32 %v465, %v476
        %v484 = vadd.f32 %v468, %v481
        %v485 = vmax.f32 %v483, 0.0
        %v486 = vmax.f32 %v484, 0.0
        %v487 = vpack.c.bf16 %v486, %v485
        %v489 = vunpack.c.l.b16 %v487
        %v490 = vunpack.c.h.b16 %v487
        %v491 = vpack.c.b16 %v489, %v489
        %v492 = vpack.c.b16 %v490, %v490
        %495 = vst [vmem:[%s343] sm:$0xf] %v491
        %496 = vst [vmem:[%s343 + $0x4] sm:$0xf] %v492
        %p497 = scmp.lt.s32.totalorder %s19, 1
        %s498 = scalar_select %p497, %s19, 1
        %p499 = scmp.lt.s32.totalorder %s20, 0
        %s500 = scalar_select %p499, %s20, 0
        %s501 = smul.addr %s498, 2
        %s502 = sadd.s32 %s500, %s501
        %s503 = smul.addr %s502, 4
        %s504 = scalar_lea.vmem %s4, %s503
        // Predicated region
        $region119: #{_lambda_.15} parent=109 // pred_check
          %p505 = pneg %p147
        $region120: #{_lambda_.15} parent=109 // pred_check_branch
          %507 = sbr.rel (%p505) target = $region122
        $region121: #{_lambda_.15} parent=109 // pred_region
          _
        $region122: #{_lambda_.15} parent=109 // pred_fallthru
          _
      $region110: #{_lambda_.15} parent=5 // pred_fallthru
        _
      %p508 = scmp.le.s32.totalorder 2, %s10
      // Predicated region
      $region123: #{_lambda_.15} parent=5 // pred_check
        %p509 = pneg %p508
      $region124: #{_lambda_.15} parent=5 // pred_check_branch
        %511 = sbr.rel (%p509) target = $region126
      $region125: #{_lambda_.15} parent=5 // pred_region
        %s512 = ssub.s32 %s10, 2
        // Predicated region
        $region127: #{_lambda_.15} parent=125 // pred_check
          %p513 = pneg %p153
        $region128: #{_lambda_.15} parent=125 // pred_check_branch
          %515 = sbr.rel (%p513) target = $region130
        $region129: #{_lambda_.15} parent=125 // pred_region
          %p516 = scmp.lt.s32.totalorder %s21, 1
          %s517 = scalar_select %p516, %s21, 1
          %p518 = scmp.lt.s32.totalorder %s22, 0
          %s519 = scalar_select %p518, %s22, 0
          %s520 = smul.addr %s517, 2
          %s521 = sadd.s32 %s519, %s520
          %s522 = smul.addr %s521, 4
          %s523 = scalar_lea.vmem %s4, %s522
        $region130: #{_lambda_.15} parent=125 // pred_fallthru
          _
      $region126: #{_lambda_.15} parent=5 // pred_fallthru
        _
    $region6: #{_lambda_.15} parent=1 // loop_footer
      %s14 = sadd.s32 1, %s10
    $region7: #{_lambda_.15} parent=1 // loop_footer_branch
      %9 = sbr.rel target = $region3
    $region8: #{_lambda_.15} parent=1 // loop_exit
      _

// kernel: _lambda_.23
$region0: #{_lambda_.23}
  #allocation0 [shape = 'u32[]', space=smem, size = 0x4, offset = 0x4, fixed_abs, tag = 'smem constant byte address 0x4 - core index']
  #allocation1 [shape = 'u32[144,128]{1,0:T(1,128)}', space=vmem, size = 0x12000, scoped, tag = 'internal scratch']
  #allocation2 [shape = 'f32[2,16]{1,0:T(2,128)}', space=vmem, size = 0x400, scoped, tag = 'scratch operand']
  %s0 = inlined_call_operand.vmem [shape: bf16[2,16,128], index: 0, kind: input, shape index: {}]
  %s1 = inlined_call_operand.vmem [shape: f32[16,1], index: 1, kind: input, shape index: {}]
  %s2 = inlined_call_operand.vmem [shape: f32[16,1], index: 2, kind: input, shape index: {}]
  %s3 = inlined_call_operand.vmem [shape: f32[16,32], index: 3, kind: input, shape index: {}]
  %s4 = inlined_call_operand.vmem [shape: f32[1,32], index: 4, kind: input, shape index: {}]
  %s5 = inlined_call_operand.vmem [shape: f32[2,32], index: 5, kind: output, shape index: {}]
  %s6 = sld [smem:[#allocation0]]
  $region38: #{_lambda_.23} parent=0
    _
  %s8 = ssub.s32 1, %s6
  %s9 = scalar_select 0, %s8, %s6
  // Predicated region
  $region2: #{_lambda_.23} parent=0 // pred_check
    _
  $region3: #{_lambda_.23} parent=0 // pred_check_branch
    %11 = sbr.rel (0) target = $region5
  $region4: #{_lambda_.23} parent=0 // pred_region
    _
  $region5: #{_lambda_.23} parent=0 // pred_fallthru
    _
  // Predicated region
  $region6: #{_lambda_.23} parent=0 // pred_check
    _
  $region7: #{_lambda_.23} parent=0 // pred_check_branch
    %13 = sbr.rel (0) target = $region9
  $region8: #{_lambda_.23} parent=0 // pred_region
    _
  $region9: #{_lambda_.23} parent=0 // pred_fallthru
    _
  // Predicated region
  $region10: #{_lambda_.23} parent=0 // pred_check
    _
  $region11: #{_lambda_.23} parent=0 // pred_check_branch
    %15 = sbr.rel (0) target = $region13
  $region12: #{_lambda_.23} parent=0 // pred_region
    _
  $region13: #{_lambda_.23} parent=0 // pred_fallthru
    _
  // Predicated region
  $region14: #{_lambda_.23} parent=0 // pred_check
    _
  $region15: #{_lambda_.23} parent=0 // pred_check_branch
    %17 = sbr.rel (0) target = $region17
  $region16: #{_lambda_.23} parent=0 // pred_region
    _
  $region17: #{_lambda_.23} parent=0 // pred_fallthru
    _
  // Predicated region
  $region18: #{_lambda_.23} parent=0 // pred_check
    _
  $region19: #{_lambda_.23} parent=0 // pred_check_branch
    %19 = sbr.rel (0) target = $region21
  $region20: #{_lambda_.23} parent=0 // pred_region
    _
  $region21: #{_lambda_.23} parent=0 // pred_fallthru
    _
  %p20 = scmp.eq.s32.totalorder 0, 0
  // Predicated region
  $region22: #{_lambda_.23} parent=0 // pred_check
    %p21 = pneg %p20
  $region23: #{_lambda_.23} parent=0 // pred_check_branch
    %23 = sbr.rel (%p21) target = $region25
  $region24: #{_lambda_.23} parent=0 // pred_region
    %vm24 = vcmask 123904
    %25 = vst.msk [vmem:[#allocation2] sm:$0x3] %vm24, 0.0
  $region25: #{_lambda_.23} parent=0 // pred_fallthru
    _
  %v26 = vld [vmem:[%s1] sm:$0xff]
  %v27 = vld [vmem:[%s1 + $0x8] sm:$0xff]
  %v28 = vld [vmem:[%s2] sm:$0xff]
  %v29 = vld [vmem:[%s2 + $0x8] sm:$0xff]
  %v30 = vld [vmem:[%s0] sm:$0xf]
  %v31 = vld [vmem:[%s0 + $0x4] sm:$0xf]
  %v32 = vld [vmem:[%s0 + $0x8] sm:$0xf]
  %v33 = vld [vmem:[%s0 + $0xc] sm:$0xf]
  %v34 = vunpack.c.l.bf16 %v30
  %v35 = vunpack.c.l.bf16 %v31
  %v36 = vunpack.c.l.bf16 %v32
  %v37 = vunpack.c.l.bf16 %v33
  %39 = vset.pattern.permute.xlu0 0
  %40 = vperm.xlu0 %39, %v26
  %v41 = vpop.permute.xlu0 %40
  %44 = vset.pattern.permute.xlu0 0
  %45 = vperm.xlu0 %44, %v27
  %v46 = vpop.permute.xlu0 %45
  %v48 = vmul.f32 %v34, %v41
  %v49 = vmul.f32 %v35, %v46
  %v50 = vmul.f32 %v36, %v41
  %v51 = vmul.f32 %v37, %v46
  %53 = vset.pattern.permute.xlu0 0
  %54 = vperm.xlu0 %53, %v28
  %v55 = vpop.permute.xlu0 %54
  %58 = vset.pattern.permute.xlu0 0
  %59 = vperm.xlu0 %58, %v29
  %v60 = vpop.permute.xlu0 %59
  %v62 = vadd.f32 %v48, %v55
  %v63 = vadd.f32 %v49, %v60
  %v64 = vadd.f32 %v50, %v55
  %v65 = vadd.f32 %v51, %v60
  %v66 = vmax.f32 %v62, 0.0
  %v67 = vmax.f32 %v63, 0.0
  %v68 = vmax.f32 %v64, 0.0
  %v69 = vmax.f32 %v65, 0.0
  %v70 = vld [vmem:[#allocation2] sm:$0x3]
  %71 = vadd.xlane.f32.xlu0 %v66
  %v72 = vpop.xlane.xlu0 %71
  %73 = vadd.xlane.f32.xlu0 %v67
  %v74 = vpop.xlane.xlu0 %73
  %75 = vadd.xlane.f32.xlu0 %v68
  %v76 = vpop.xlane.xlu0 %75
  %77 = vadd.xlane.f32.xlu0 %v69
  %v78 = vpop.xlane.xlu0 %77
  %v83 = vlaneseq
  %v84 = vand.u32 %v83, 127
  %v85 = vlaneseq
  %v86 = vshrl.u32 %v85, 7
  %v87 = vsub.s32 %v84, %v86
  %v88 = vrot.slane %v72, %v87
  %v89 = vadd.s32 %v84, 4294967288
  %v90 = vlaneseq
  %v91 = vshrl.u32 %v90, 7
  %v92 = vsub.s32 %v89, %v91
  %v93 = vrot.slane %v74, %v92
  %vm94 = vcmask 130112
  %v95 = vsel %vm94, %v93, %v88
  %v96 = vlaneseq
  %v97 = vshrl.u32 %v96, 7
  %v98 = vsub.s32 %v84, %v97
  %v99 = vrot.slane %v76, %v98
  %v100 = vlaneseq
  %v101 = vshrl.u32 %v100, 7
  %v102 = vsub.s32 %v89, %v101
  %v103 = vrot.slane %v78, %v102
  %v104 = vsel %vm94, %v103, %v99
  %vm105 = vcmask 1041409
  %v106 = vsel %vm105, %v104, %v95
  %v108 = vadd.f32 %v70, %v106
  %vm109 = vcmask 123904
  %110 = vst.msk [vmem:[#allocation2] sm:$0x3] %vm109, %v108
  // Predicated region
  $region26: #{_lambda_.23} parent=0 // pred_check
    %p111 = pneg %p20
  $region27: #{_lambda_.23} parent=0 // pred_check_branch
    %113 = sbr.rel (%p111) target = $region29
  $region28: #{_lambda_.23} parent=0 // pred_region
    %v114 = vld [vmem:[%s2] sm:$0xff]
    %v115 = vld [vmem:[%s2 + $0x8] sm:$0xff]
    %v116 = vmax.f32 %v114, 0.0
    %v117 = vmax.f32 %v115, 0.0
    %v118 = vmul.f32 %v116, 124.0
    %v119 = vmul.f32 %v117, 124.0
    %v120 = vld [vmem:[#allocation2] sm:$0x3]
    %123 = vset.pattern.permute.xlu0 0
    %124 = vperm.xlu0 %123, %v118
    %v125 = vpop.permute.xlu0 %124
    %126 = vset.pattern.permute.xlu0 0
    %127 = vperm.xlu0 %126, %v119
    %v128 = vpop.permute.xlu0 %127
    %v129 = vlaneseq
    %v130 = vshrl.u32 %v129, 7
    %v131 = vsub.s32 %v84, %v130
    %v132 = vrot.slane %v125, %v131
    %v133 = vlaneseq
    %v134 = vshrl.u32 %v133, 7
    %v135 = vsub.s32 %v89, %v134
    %v136 = vrot.slane %v128, %v135
    %v137 = vsel %vm94, %v136, %v132
    %v139 = vsub.f32 %v120, %v137
    %v140 = vmul.f32 %v139, 0.25
    %v141 = vld [vmem:[%s3] sm:$0xff]
    %v142 = vld [vmem:[%s3 + $0x8] sm:$0xff]
    %v143 = vld [vmem:[%s4] sm:$0x1]
    %v145 = vlaneseq
    %v146 = vshrl.u32 %v145, 7
    %v147 = vsub.s32 0, %v146
    %v148 = vrot.slane %v143, %v147
    %vm150 = vcmask 130048
    %v152 = vsel %vm150, %v140, 0
    %154 = vmatprep.subr.mxu0 0.0
    %155 = vmatpush1.msra.mxu0 0.0
    %156 = vmatprep.subr.mxu0 0.0
    %157 = vmatpush1.msra.mxu0 0.0
    %158 = vmatprep.subr.mxu0 0.0
    %159 = vmatpush1.msra.mxu0 0.0
    %160 = vmatprep.subr.mxu0 0.0
    %161 = vmatpush1.msra.mxu0 0.0
    %162 = vmatprep.subr.mxu0 0.0
    %163 = vmatpush1.msra.mxu0 0.0
    %164 = vmatprep.subr.mxu0 0.0
    %165 = vmatpush1.msra.mxu0 0.0
    %166 = vmatprep.subr.mxu0 0.0
    %167 = vmatpush1.msra.mxu0 0.0
    %168 = vmatprep.subr.mxu0 0.0
    %169 = vmatpush1.msra.mxu0 0.0
    %170 = vmatprep.subr.mxu0 0.0
    %171 = vmatpush1.msra.mxu0 0.0
    %172 = vmatprep.subr.mxu0 0.0
    %173 = vmatpush1.msra.mxu0 0.0
    %174 = vmatprep.subr.mxu0 0.0
    %175 = vmatpush1.msra.mxu0 0.0
    %176 = vmatprep.subr.mxu0 0.0
    %177 = vmatpush1.msra.mxu0 0.0
    %178 = vmatprep.subr.mxu0 0.0
    %179 = vmatpush1.msra.mxu0 0.0
    %180 = vmatprep.subr.mxu0 0.0
    %181 = vmatpush1.msra.mxu0 0.0
    %182 = vmatprep.subr.mxu0 0.0
    %183 = vmatpush1.msra.mxu0 %v142
    %184 = vmatprep.subr.mxu0 0.0
    %185 = vmatpush1.msra.mxu0 %v141
    %186 = vmatprep.subr.mxu0 0.0
    %187 = vmatpush2.msra.mxu0 0.0
    %188 = vmatprep.subr.mxu0 0.0
    %189 = vmatpush2.msra.mxu0 0.0
    %190 = vmatprep.subr.mxu0 0.0
    %191 = vmatpush2.msra.mxu0 0.0
    %192 = vmatprep.subr.mxu0 0.0
    %193 = vmatpush2.msra.mxu0 0.0
    %194 = vmatprep.subr.mxu0 0.0
    %195 = vmatpush2.msra.mxu0 0.0
    %196 = vmatprep.subr.mxu0 0.0
    %197 = vmatpush2.msra.mxu0 0.0
    %198 = vmatprep.subr.mxu0 0.0
    %199 = vmatpush2.msra.mxu0 0.0
    %200 = vmatprep.subr.mxu0 0.0
    %201 = vmatpush2.msra.mxu0 0.0
    %202 = vmatprep.subr.mxu0 0.0
    %203 = vmatpush2.msra.mxu0 0.0
    %204 = vmatprep.subr.mxu0 0.0
    %205 = vmatpush2.msra.mxu0 0.0
    %206 = vmatprep.subr.mxu0 0.0
    %207 = vmatpush2.msra.mxu0 0.0
    %208 = vmatprep.subr.mxu0 0.0
    %209 = vmatpush2.msra.mxu0 0.0
    %210 = vmatprep.subr.mxu0 0.0
    %211 = vmatpush2.msra.mxu0 0.0
    %212 = vmatprep.subr.mxu0 0.0
    %213 = vmatpush2.msra.mxu0 0.0
    %214 = vmatprep.subr.mxu0 0.0
    %215 = vmatpush2.msra.mxu0 0.0
    %216 = vmatprep.subr.mxu0 0.0
    %217 = vmatpush2.msra.mxu0 0.0
    %218 = vmatprep.mubr.f32.mxu0 0.0
    %219 = vmatmul.mubr.f32.gmra.mxu0 %v152
    %v220 = vpop.f32.mrf.mxu0
    %v221 = vadd.f32 %v148, %v220
    %v222 = vpop.f32.mrf.mxu0
    %223 = vdwg.mxu0
    %vm224 = vcmask 254976
    %225 = vst.msk [vmem:[%s5] sm:$0x3] %vm224, %v221
  $region29: #{_lambda_.23} parent=0 // pred_fallthru
    _
  // Predicated region
  $region30: #{_lambda_.23} parent=0 // pred_check
    _
  $region31: #{_lambda_.23} parent=0 // pred_check_branch
    %227 = sbr.rel (0) target = $region33
  $region32: #{_lambda_.23} parent=0 // pred_region
    _
  $region33: #{_lambda_.23} parent=0 // pred_fallthru
    _
  // Predicated region
  $region34: #{_lambda_.23} parent=0 // pred_check
    _
  $region35: #{_lambda_.23} parent=0 // pred_check_branch
    %229 = sbr.rel (0) target = $region37
  $region36: #{_lambda_.23} parent=0 // pred_region
    _
  $region37: #{_lambda_.23} parent=0 // pred_fallthru
    _

</llo_original>
